<compile_context>
chip_gen: v7x
topology: tpu7x:2x2x1
jax: 0.10.0
libtpu: 0.0.40
codegen_flags: <defaults>
</compile_context>

<pallas_src>
import jax
import jax.numpy as jnp
from jax.experimental import pallas as pl
from jax.experimental.pallas import tpu as pltpu


def lstm_recurrence_kernel(xw_ref, w_hh_ref, w_fc_ref, b_fc_ref, out_ref):
    # xw_ref:   (T, B, 4H)  precomputed x_t @ W_ih^T + (b_ih + b_hh)   (f32)
    # w_hh_ref: (H, 4H)     pre-transposed recurrence weight W_hh^T
    # w_fc_ref: (1, H)      final linear weight row
    # b_fc_ref: (1, 1)      final linear bias
    # out_ref:  (B, 1)      sigmoid probabilities
    T, B, _ = xw_ref.shape
    H = w_fc_ref.shape[1]

    # Hoisted: loaded once, stays vreg-resident for all T steps.
    w_hh = w_hh_ref[...]                                   # (H, 4H)

    def step(t, carry):
        h, c = carry
        # Only the serial part lives in the loop: one (B,H)@(H,4H) MXU contraction,
        # then whole-vreg gate slices (H = 128 lanes each).
        gates = jnp.dot(h, w_hh, preferred_element_type=jnp.float32) + xw_ref[t]
        i = jax.nn.sigmoid(gates[:, 0 * H:1 * H])
        f = jax.nn.sigmoid(gates[:, 1 * H:2 * H])
        g = jnp.tanh(gates[:, 2 * H:3 * H])
        o = jax.nn.sigmoid(gates[:, 3 * H:4 * H])
        c = f * c + i * g
        h = o * jnp.tanh(c)
        return (h, c)

    h0 = jnp.zeros((B, H), jnp.float32)
    c0 = jnp.zeros((B, H), jnp.float32)
    # Short fixed trip count -> unroll for LLO scheduler visibility.
    h, _ = jax.lax.fori_loop(0, T, step, (h0, c0), unroll=True)

    # Linear(H, 1) + sigmoid as VPU multiply + cross-lane reduce (XLU), not an
    # N=1 MXU matmul.
    logit = jnp.sum(h * w_fc_ref[...], axis=-1, keepdims=True) + b_fc_ref[...]
    out_ref[...] = jax.nn.sigmoid(logit)


def lstm_classifier_forward(token_ids, params):
    """token_ids: (B, T) int32. Returns sigmoid(fc(h_T)).squeeze(), shape (B,)."""
    emb = params["embedding"]                              # (V, E)
    w_ih, w_hh = params["w_ih"], params["w_hh"]            # (4H, E), (4H, H)
    b = (params["b_ih"] + params["b_hh"]).astype(jnp.float32)      # (4H,)
    w_fc = params["w_fc"].astype(jnp.float32)              # (1, H)
    b_fc = params["b_fc"].reshape(1, 1).astype(jnp.float32)

    B, T = token_ids.shape
    E = emb.shape[1]
    H = w_hh.shape[1]

    # Embedding lookup (frozen gather) stays in the wrapper; go time-major.
    x = emb[token_ids].astype(jnp.float32)                 # (B, T, E)
    x = jnp.transpose(x, (1, 0, 2))                        # (T, B, E)

    # Hoist the time-independent input projection + fused bias out of the
    # recurrence: one parallel (T*B, E) @ (E, 4H) matmul.
    xw = (x.reshape(T * B, E) @ w_ih.T.astype(jnp.float32) + b).reshape(T, B, 4 * H)

    w_hh_t = w_hh.T.astype(jnp.float32)                    # (H, 4H)

    vmem = pltpu.MemorySpace.VMEM
    out = pl.pallas_call(
        lstm_recurrence_kernel,
        out_shape=jax.ShapeDtypeStruct((B, 1), jnp.float32),
        in_specs=[pl.BlockSpec(memory_space=vmem)] * 4,    # everything resident (tiny)
        out_specs=pl.BlockSpec(memory_space=vmem),
    )(xw, w_hh_t, w_fc, b_fc)

    # TODO(synk): for long sequences, chunk the time axis with a grid + BlockSpec on
    # xw (time axis "arbitrary", h/c in VMEM scratch) instead of keeping the whole
    # (T, B, 4H) slab VMEM-resident (v7x VMEM is 64 MiB).
    return jnp.squeeze(out)                                # matches .squeeze() in PyTorch


def make_params(key, vocab=20, embed_dim=16, hidden_dim=128):
    ks = jax.random.split(key, 7)
    bound = 1.0 / jnp.sqrt(hidden_dim)
    u = lambda k, shape: jax.random.uniform(k, shape, jnp.float32, -bound, bound)
    return {
        "embedding": jax.random.normal(ks[0], (vocab, embed_dim), jnp.float32),
        "w_ih": u(ks[1], (4 * hidden_dim, embed_dim)),
        "w_hh": u(ks[2], (4 * hidden_dim, hidden_dim)),
        "b_ih": u(ks[3], (4 * hidden_dim,)),
        "b_hh": u(ks[4], (4 * hidden_dim,)),
        "w_fc": u(ks[5], (1, hidden_dim)),
        "b_fc": u(ks[6], (1,)),
    }


def reference_forward(token_ids, params):
    """Pure-JAX reference (lax.scan LSTM) for validation."""
    H = params["w_hh"].shape[1]
    x = params["embedding"][token_ids]                     # (B, T, E)
    B = x.shape[0]
    b = params["b_ih"] + params["b_hh"]

    def step(carry, x_t):
        h, c = carry
        gates = x_t @ params["w_ih"].T + h @ params["w_hh"].T + b
        i = jax.nn.sigmoid(gates[:, 0 * H:1 * H])
        f = jax.nn.sigmoid(gates[:, 1 * H:2 * H])
        g = jnp.tanh(gates[:, 2 * H:3 * H])
        o = jax.nn.sigmoid(gates[:, 3 * H:4 * H])
        c = f * c + i * g
        h = o * jnp.tanh(c)
        return (h, c), None

    h0 = jnp.zeros((B, H), jnp.float32)
    (h, _), _ = jax.lax.scan(step, (h0, h0), jnp.transpose(x, (1, 0, 2)))
    out = jax.nn.sigmoid(h @ params["w_fc"].T + params["b_fc"])
    return jnp.squeeze(out)


if __name__ == "__main__":
    key = jax.random.PRNGKey(0)
    pkey, xkey = jax.random.split(key)

    VOCAB, EMBED, HIDDEN = 20, 16, 128   # hidden_dim=128 = PyTorch module default
    B, T = 2, 8

    params = make_params(pkey, vocab=VOCAB, embed_dim=EMBED, hidden_dim=HIDDEN)
    token_ids = jax.random.randint(xkey, (B, T), 0, VOCAB, dtype=jnp.int32)

    out = jax.block_until_ready(lstm_classifier_forward(token_ids, params))
    ref = jax.block_until_ready(reference_forward(token_ids, params))

    assert out.shape == (B,)
    assert jnp.allclose(out, ref, atol=1e-5, rtol=1e-5), (out, ref)
    print("KERNEL_OK")
</pallas_src>

<mosaic_0001>
module attributes {stable_mosaic.version = 11 : i64} {
  func.func @lstm_recurrence_kernel(%arg0: memref<8x2x512xf32, #tpu.memory_space<vmem>>, %arg1: memref<128x512xf32, #tpu.memory_space<vmem>>, %arg2: memref<1x128xf32, #tpu.memory_space<vmem>>, %arg3: memref<1x1xf32, #tpu.memory_space<vmem>>, %arg4: memref<2x1xf32, #tpu.memory_space<vmem>>) attributes {dimension_semantics = [], scalar_prefetch = 0 : i64, scratch_operands = 0 : i64, tpu.core_type = #tpu.core_type<tc>} {
    %c0 = arith.constant 0 : index
    %c0_0 = arith.constant 0 : index
    %0 = vector.load %arg1[%c0, %c0_0] : memref<128x512xf32, #tpu.memory_space<vmem>>, vector<128x512xf32>
    %cst = arith.constant 0.000000e+00 : f32
    %1 = vector.broadcast %cst : f32 to vector<2x128xf32>
    %cst_1 = arith.constant 0.000000e+00 : f32
    %2 = vector.broadcast %cst_1 : f32 to vector<2x128xf32>
    %c0_i32 = arith.constant 0 : i32
    %cst_2 = arith.constant dense<0.000000e+00> : vector<2x512xf32>
    %3 = tpu.matmul %1, %0, %cst_2 {dimension_numbers = #tpu.dot_dimension_numbers<[1], [0], [0], [1], [0, 0, 1, 1], [], []>} : vector<2x128xf32>, vector<128x512xf32>, vector<2x512xf32> -> vector<2x512xf32>
    %4 = arith.index_cast %c0_i32 : i32 to index
    %c0_3 = arith.constant 0 : index
    %c0_4 = arith.constant 0 : index
    %5 = vector.load %arg0[%4, %c0_3, %c0_4] : memref<8x2x512xf32, #tpu.memory_space<vmem>>, vector<1x2x512xf32>
    %6 = vector.shape_cast %5 : vector<1x2x512xf32> to vector<2x512xf32>
    %7 = arith.addf %3, %6 : vector<2x512xf32>
    %8 = vector.extract_strided_slice %7 {offsets = [0, 0], sizes = [2, 128], strides = [1, 1]} : vector<2x512xf32> to vector<2x128xf32>
    %9 = arith.negf %8 : vector<2x128xf32>
    %10 = math.exp %9 : vector<2x128xf32>
    %cst_5 = arith.constant 1.000000e+00 : f32
    %11 = vector.broadcast %cst_5 : f32 to vector<2x128xf32>
    %12 = arith.addf %11, %10 : vector<2x128xf32>
    %13 = arith.divf %11, %12 : vector<2x128xf32>
    %14 = vector.extract_strided_slice %7 {offsets = [0, 128], sizes = [2, 128], strides = [1, 1]} : vector<2x512xf32> to vector<2x128xf32>
    %15 = arith.negf %14 : vector<2x128xf32>
    %16 = math.exp %15 : vector<2x128xf32>
    %cst_6 = arith.constant 1.000000e+00 : f32
    %17 = vector.broadcast %cst_6 : f32 to vector<2x128xf32>
    %18 = arith.addf %17, %16 : vector<2x128xf32>
    %19 = arith.divf %17, %18 : vector<2x128xf32>
    %20 = vector.extract_strided_slice %7 {offsets = [0, 256], sizes = [2, 128], strides = [1, 1]} : vector<2x512xf32> to vector<2x128xf32>
    %21 = math.tanh %20 : vector<2x128xf32>
    %22 = vector.extract_strided_slice %7 {offsets = [0, 384], sizes = [2, 128], strides = [1, 1]} : vector<2x512xf32> to vector<2x128xf32>
    %23 = arith.negf %22 : vector<2x128xf32>
    %24 = math.exp %23 : vector<2x128xf32>
    %cst_7 = arith.constant 1.000000e+00 : f32
    %25 = vector.broadcast %cst_7 : f32 to vector<2x128xf32>
    %26 = arith.addf %25, %24 : vector<2x128xf32>
    %27 = arith.divf %25, %26 : vector<2x128xf32>
    %28 = arith.mulf %19, %2 : vector<2x128xf32>
    %29 = arith.mulf %13, %21 : vector<2x128xf32>
    %30 = arith.addf %28, %29 : vector<2x128xf32>
    %31 = math.tanh %30 : vector<2x128xf32>
    %32 = arith.mulf %27, %31 : vector<2x128xf32>
    %c1_i32 = arith.constant 1 : i32
    %cst_8 = arith.constant dense<0.000000e+00> : vector<2x512xf32>
    %33 = tpu.matmul %32, %0, %cst_8 {dimension_numbers = #tpu.dot_dimension_numbers<[1], [0], [0], [1], [0, 0, 1, 1], [], []>} : vector<2x128xf32>, vector<128x512xf32>, vector<2x512xf32> -> vector<2x512xf32>
    %34 = arith.index_cast %c1_i32 : i32 to index
    %c0_9 = arith.constant 0 : index
    %c0_10 = arith.constant 0 : index
    %35 = vector.load %arg0[%34, %c0_9, %c0_10] : memref<8x2x512xf32, #tpu.memory_space<vmem>>, vector<1x2x512xf32>
    %36 = vector.shape_cast %35 : vector<1x2x512xf32> to vector<2x512xf32>
    %37 = arith.addf %33, %36 : vector<2x512xf32>
    %38 = vector.extract_strided_slice %37 {offsets = [0, 0], sizes = [2, 128], strides = [1, 1]} : vector<2x512xf32> to vector<2x128xf32>
    %39 = arith.negf %38 : vector<2x128xf32>
    %40 = math.exp %39 : vector<2x128xf32>
    %cst_11 = arith.constant 1.000000e+00 : f32
    %41 = vector.broadcast %cst_11 : f32 to vector<2x128xf32>
    %42 = arith.addf %41, %40 : vector<2x128xf32>
    %43 = arith.divf %41, %42 : vector<2x128xf32>
    %44 = vector.extract_strided_slice %37 {offsets = [0, 128], sizes = [2, 128], strides = [1, 1]} : vector<2x512xf32> to vector<2x128xf32>
    %45 = arith.negf %44 : vector<2x128xf32>
    %46 = math.exp %45 : vector<2x128xf32>
    %cst_12 = arith.constant 1.000000e+00 : f32
    %47 = vector.broadcast %cst_12 : f32 to vector<2x128xf32>
    %48 = arith.addf %47, %46 : vector<2x128xf32>
    %49 = arith.divf %47, %48 : vector<2x128xf32>
    %50 = vector.extract_strided_slice %37 {offsets = [0, 256], sizes = [2, 128], strides = [1, 1]} : vector<2x512xf32> to vector<2x128xf32>
    %51 = math.tanh %50 : vector<2x128xf32>
    %52 = vector.extract_strided_slice %37 {offsets = [0, 384], sizes = [2, 128], strides = [1, 1]} : vector<2x512xf32> to vector<2x128xf32>
    %53 = arith.negf %52 : vector<2x128xf32>
    %54 = math.exp %53 : vector<2x128xf32>
    %cst_13 = arith.constant 1.000000e+00 : f32
    %55 = vector.broadcast %cst_13 : f32 to vector<2x128xf32>
    %56 = arith.addf %55, %54 : vector<2x128xf32>
    %57 = arith.divf %55, %56 : vector<2x128xf32>
    %58 = arith.mulf %49, %30 : vector<2x128xf32>
    %59 = arith.mulf %43, %51 : vector<2x128xf32>
    %60 = arith.addf %58, %59 : vector<2x128xf32>
    %61 = math.tanh %60 : vector<2x128xf32>
    %62 = arith.mulf %57, %61 : vector<2x128xf32>
    %c2_i32 = arith.constant 2 : i32
    %cst_14 = arith.constant dense<0.000000e+00> : vector<2x512xf32>
    %63 = tpu.matmul %62, %0, %cst_14 {dimension_numbers = #tpu.dot_dimension_numbers<[1], [0], [0], [1], [0, 0, 1, 1], [], []>} : vector<2x128xf32>, vector<128x512xf32>, vector<2x512xf32> -> vector<2x512xf32>
    %64 = arith.index_cast %c2_i32 : i32 to index
    %c0_15 = arith.constant 0 : index
    %c0_16 = arith.constant 0 : index
    %65 = vector.load %arg0[%64, %c0_15, %c0_16] : memref<8x2x512xf32, #tpu.memory_space<vmem>>, vector<1x2x512xf32>
    %66 = vector.shape_cast %65 : vector<1x2x512xf32> to vector<2x512xf32>
    %67 = arith.addf %63, %66 : vector<2x512xf32>
    %68 = vector.extract_strided_slice %67 {offsets = [0, 0], sizes = [2, 128], strides = [1, 1]} : vector<2x512xf32> to vector<2x128xf32>
    %69 = arith.negf %68 : vector<2x128xf32>
    %70 = math.exp %69 : vector<2x128xf32>
    %cst_17 = arith.constant 1.000000e+00 : f32
    %71 = vector.broadcast %cst_17 : f32 to vector<2x128xf32>
    %72 = arith.addf %71, %70 : vector<2x128xf32>
    %73 = arith.divf %71, %72 : vector<2x128xf32>
    %74 = vector.extract_strided_slice %67 {offsets = [0, 128], sizes = [2, 128], strides = [1, 1]} : vector<2x512xf32> to vector<2x128xf32>
    %75 = arith.negf %74 : vector<2x128xf32>
    %76 = math.exp %75 : vector<2x128xf32>
    %cst_18 = arith.constant 1.000000e+00 : f32
    %77 = vector.broadcast %cst_18 : f32 to vector<2x128xf32>
    %78 = arith.addf %77, %76 : vector<2x128xf32>
    %79 = arith.divf %77, %78 : vector<2x128xf32>
    %80 = vector.extract_strided_slice %67 {offsets = [0, 256], sizes = [2, 128], strides = [1, 1]} : vector<2x512xf32> to vector<2x128xf32>
    %81 = math.tanh %80 : vector<2x128xf32>
    %82 = vector.extract_strided_slice %67 {offsets = [0, 384], sizes = [2, 128], strides = [1, 1]} : vector<2x512xf32> to vector<2x128xf32>
    %83 = arith.negf %82 : vector<2x128xf32>
    %84 = math.exp %83 : vector<2x128xf32>
    %cst_19 = arith.constant 1.000000e+00 : f32
    %85 = vector.broadcast %cst_19 : f32 to vector<2x128xf32>
    %86 = arith.addf %85, %84 : vector<2x128xf32>
    %87 = arith.divf %85, %86 : vector<2x128xf32>
    %88 = arith.mulf %79, %60 : vector<2x128xf32>
    %89 = arith.mulf %73, %81 : vector<2x128xf32>
    %90 = arith.addf %88, %89 : vector<2x128xf32>
    %91 = math.tanh %90 : vector<2x128xf32>
    %92 = arith.mulf %87, %91 : vector<2x128xf32>
    %c3_i32 = arith.constant 3 : i32
    %cst_20 = arith.constant dense<0.000000e+00> : vector<2x512xf32>
    %93 = tpu.matmul %92, %0, %cst_20 {dimension_numbers = #tpu.dot_dimension_numbers<[1], [0], [0], [1], [0, 0, 1, 1], [], []>} : vector<2x128xf32>, vector<128x512xf32>, vector<2x512xf32> -> vector<2x512xf32>
    %94 = arith.index_cast %c3_i32 : i32 to index
    %c0_21 = arith.constant 0 : index
    %c0_22 = arith.constant 0 : index
    %95 = vector.load %arg0[%94, %c0_21, %c0_22] : memref<8x2x512xf32, #tpu.memory_space<vmem>>, vector<1x2x512xf32>
    %96 = vector.shape_cast %95 : vector<1x2x512xf32> to vector<2x512xf32>
    %97 = arith.addf %93, %96 : vector<2x512xf32>
    %98 = vector.extract_strided_slice %97 {offsets = [0, 0], sizes = [2, 128], strides = [1, 1]} : vector<2x512xf32> to vector<2x128xf32>
    %99 = arith.negf %98 : vector<2x128xf32>
    %100 = math.exp %99 : vector<2x128xf32>
    %cst_23 = arith.constant 1.000000e+00 : f32
    %101 = vector.broadcast %cst_23 : f32 to vector<2x128xf32>
    %102 = arith.addf %101, %100 : vector<2x128xf32>
    %103 = arith.divf %101, %102 : vector<2x128xf32>
    %104 = vector.extract_strided_slice %97 {offsets = [0, 128], sizes = [2, 128], strides = [1, 1]} : vector<2x512xf32> to vector<2x128xf32>
    %105 = arith.negf %104 : vector<2x128xf32>
    %106 = math.exp %105 : vector<2x128xf32>
    %cst_24 = arith.constant 1.000000e+00 : f32
    %107 = vector.broadcast %cst_24 : f32 to vector<2x128xf32>
    %108 = arith.addf %107, %106 : vector<2x128xf32>
    %109 = arith.divf %107, %108 : vector<2x128xf32>
    %110 = vector.extract_strided_slice %97 {offsets = [0, 256], sizes = [2, 128], strides = [1, 1]} : vector<2x512xf32> to vector<2x128xf32>
    %111 = math.tanh %110 : vector<2x128xf32>
    %112 = vector.extract_strided_slice %97 {offsets = [0, 384], sizes = [2, 128], strides = [1, 1]} : vector<2x512xf32> to vector<2x128xf32>
    %113 = arith.negf %112 : vector<2x128xf32>
    %114 = math.exp %113 : vector<2x128xf32>
    %cst_25 = arith.constant 1.000000e+00 : f32
    %115 = vector.broadcast %cst_25 : f32 to vector<2x128xf32>
    %116 = arith.addf %115, %114 : vector<2x128xf32>
    %117 = arith.divf %115, %116 : vector<2x128xf32>
    %118 = arith.mulf %109, %90 : vector<2x128xf32>
    %119 = arith.mulf %103, %111 : vector<2x128xf32>
    %120 = arith.addf %118, %119 : vector<2x128xf32>
    %121 = math.tanh %120 : vector<2x128xf32>
    %122 = arith.mulf %117, %121 : vector<2x128xf32>
    %c4_i32 = arith.constant 4 : i32
    %cst_26 = arith.constant dense<0.000000e+00> : vector<2x512xf32>
    %123 = tpu.matmul %122, %0, %cst_26 {dimension_numbers = #tpu.dot_dimension_numbers<[1], [0], [0], [1], [0, 0, 1, 1], [], []>} : vector<2x128xf32>, vector<128x512xf32>, vector<2x512xf32> -> vector<2x512xf32>
    %124 = arith.index_cast %c4_i32 : i32 to index
    %c0_27 = arith.constant 0 : index
    %c0_28 = arith.constant 0 : index
    %125 = vector.load %arg0[%124, %c0_27, %c0_28] : memref<8x2x512xf32, #tpu.memory_space<vmem>>, vector<1x2x512xf32>
    %126 = vector.shape_cast %125 : vector<1x2x512xf32> to vector<2x512xf32>
    %127 = arith.addf %123, %126 : vector<2x512xf32>
    %128 = vector.extract_strided_slice %127 {offsets = [0, 0], sizes = [2, 128], strides = [1, 1]} : vector<2x512xf32> to vector<2x128xf32>
    %129 = arith.negf %128 : vector<2x128xf32>
    %130 = math.exp %129 : vector<2x128xf32>
    %cst_29 = arith.constant 1.000000e+00 : f32
    %131 = vector.broadcast %cst_29 : f32 to vector<2x128xf32>
    %132 = arith.addf %131, %130 : vector<2x128xf32>
    %133 = arith.divf %131, %132 : vector<2x128xf32>
    %134 = vector.extract_strided_slice %127 {offsets = [0, 128], sizes = [2, 128], strides = [1, 1]} : vector<2x512xf32> to vector<2x128xf32>
    %135 = arith.negf %134 : vector<2x128xf32>
    %136 = math.exp %135 : vector<2x128xf32>
    %cst_30 = arith.constant 1.000000e+00 : f32
    %137 = vector.broadcast %cst_30 : f32 to vector<2x128xf32>
    %138 = arith.addf %137, %136 : vector<2x128xf32>
    %139 = arith.divf %137, %138 : vector<2x128xf32>
    %140 = vector.extract_strided_slice %127 {offsets = [0, 256], sizes = [2, 128], strides = [1, 1]} : vector<2x512xf32> to vector<2x128xf32>
    %141 = math.tanh %140 : vector<2x128xf32>
    %142 = vector.extract_strided_slice %127 {offsets = [0, 384], sizes = [2, 128], strides = [1, 1]} : vector<2x512xf32> to vector<2x128xf32>
    %143 = arith.negf %142 : vector<2x128xf32>
    %144 = math.exp %143 : vector<2x128xf32>
    %cst_31 = arith.constant 1.000000e+00 : f32
    %145 = vector.broadcast %cst_31 : f32 to vector<2x128xf32>
    %146 = arith.addf %145, %144 : vector<2x128xf32>
    %147 = arith.divf %145, %146 : vector<2x128xf32>
    %148 = arith.mulf %139, %120 : vector<2x128xf32>
    %149 = arith.mulf %133, %141 : vector<2x128xf32>
    %150 = arith.addf %148, %149 : vector<2x128xf32>
    %151 = math.tanh %150 : vector<2x128xf32>
    %152 = arith.mulf %147, %151 : vector<2x128xf32>
    %c5_i32 = arith.constant 5 : i32
    %cst_32 = arith.constant dense<0.000000e+00> : vector<2x512xf32>
    %153 = tpu.matmul %152, %0, %cst_32 {dimension_numbers = #tpu.dot_dimension_numbers<[1], [0], [0], [1], [0, 0, 1, 1], [], []>} : vector<2x128xf32>, vector<128x512xf32>, vector<2x512xf32> -> vector<2x512xf32>
    %154 = arith.index_cast %c5_i32 : i32 to index
    %c0_33 = arith.constant 0 : index
    %c0_34 = arith.constant 0 : index
    %155 = vector.load %arg0[%154, %c0_33, %c0_34] : memref<8x2x512xf32, #tpu.memory_space<vmem>>, vector<1x2x512xf32>
    %156 = vector.shape_cast %155 : vector<1x2x512xf32> to vector<2x512xf32>
    %157 = arith.addf %153, %156 : vector<2x512xf32>
    %158 = vector.extract_strided_slice %157 {offsets = [0, 0], sizes = [2, 128], strides = [1, 1]} : vector<2x512xf32> to vector<2x128xf32>
    %159 = arith.negf %158 : vector<2x128xf32>
    %160 = math.exp %159 : vector<2x128xf32>
    %cst_35 = arith.constant 1.000000e+00 : f32
    %161 = vector.broadcast %cst_35 : f32 to vector<2x128xf32>
    %162 = arith.addf %161, %160 : vector<2x128xf32>
    %163 = arith.divf %161, %162 : vector<2x128xf32>
    %164 = vector.extract_strided_slice %157 {offsets = [0, 128], sizes = [2, 128], strides = [1, 1]} : vector<2x512xf32> to vector<2x128xf32>
    %165 = arith.negf %164 : vector<2x128xf32>
    %166 = math.exp %165 : vector<2x128xf32>
    %cst_36 = arith.constant 1.000000e+00 : f32
    %167 = vector.broadcast %cst_36 : f32 to vector<2x128xf32>
    %168 = arith.addf %167, %166 : vector<2x128xf32>
    %169 = arith.divf %167, %168 : vector<2x128xf32>
    %170 = vector.extract_strided_slice %157 {offsets = [0, 256], sizes = [2, 128], strides = [1, 1]} : vector<2x512xf32> to vector<2x128xf32>
    %171 = math.tanh %170 : vector<2x128xf32>
    %172 = vector.extract_strided_slice %157 {offsets = [0, 384], sizes = [2, 128], strides = [1, 1]} : vector<2x512xf32> to vector<2x128xf32>
    %173 = arith.negf %172 : vector<2x128xf32>
    %174 = math.exp %173 : vector<2x128xf32>
    %cst_37 = arith.constant 1.000000e+00 : f32
    %175 = vector.broadcast %cst_37 : f32 to vector<2x128xf32>
    %176 = arith.addf %175, %174 : vector<2x128xf32>
    %177 = arith.divf %175, %176 : vector<2x128xf32>
    %178 = arith.mulf %169, %150 : vector<2x128xf32>
    %179 = arith.mulf %163, %171 : vector<2x128xf32>
    %180 = arith.addf %178, %179 : vector<2x128xf32>
    %181 = math.tanh %180 : vector<2x128xf32>
    %182 = arith.mulf %177, %181 : vector<2x128xf32>
    %c6_i32 = arith.constant 6 : i32
    %cst_38 = arith.constant dense<0.000000e+00> : vector<2x512xf32>
    %183 = tpu.matmul %182, %0, %cst_38 {dimension_numbers = #tpu.dot_dimension_numbers<[1], [0], [0], [1], [0, 0, 1, 1], [], []>} : vector<2x128xf32>, vector<128x512xf32>, vector<2x512xf32> -> vector<2x512xf32>
    %184 = arith.index_cast %c6_i32 : i32 to index
    %c0_39 = arith.constant 0 : index
    %c0_40 = arith.constant 0 : index
    %185 = vector.load %arg0[%184, %c0_39, %c0_40] : memref<8x2x512xf32, #tpu.memory_space<vmem>>, vector<1x2x512xf32>
    %186 = vector.shape_cast %185 : vector<1x2x512xf32> to vector<2x512xf32>
    %187 = arith.addf %183, %186 : vector<2x512xf32>
    %188 = vector.extract_strided_slice %187 {offsets = [0, 0], sizes = [2, 128], strides = [1, 1]} : vector<2x512xf32> to vector<2x128xf32>
    %189 = arith.negf %188 : vector<2x128xf32>
    %190 = math.exp %189 : vector<2x128xf32>
    %cst_41 = arith.constant 1.000000e+00 : f32
    %191 = vector.broadcast %cst_41 : f32 to vector<2x128xf32>
    %192 = arith.addf %191, %190 : vector<2x128xf32>
    %193 = arith.divf %191, %192 : vector<2x128xf32>
    %194 = vector.extract_strided_slice %187 {offsets = [0, 128], sizes = [2, 128], strides = [1, 1]} : vector<2x512xf32> to vector<2x128xf32>
    %195 = arith.negf %194 : vector<2x128xf32>
    %196 = math.exp %195 : vector<2x128xf32>
    %cst_42 = arith.constant 1.000000e+00 : f32
    %197 = vector.broadcast %cst_42 : f32 to vector<2x128xf32>
    %198 = arith.addf %197, %196 : vector<2x128xf32>
    %199 = arith.divf %197, %198 : vector<2x128xf32>
    %200 = vector.extract_strided_slice %187 {offsets = [0, 256], sizes = [2, 128], strides = [1, 1]} : vector<2x512xf32> to vector<2x128xf32>
    %201 = math.tanh %200 : vector<2x128xf32>
    %202 = vector.extract_strided_slice %187 {offsets = [0, 384], sizes = [2, 128], strides = [1, 1]} : vector<2x512xf32> to vector<2x128xf32>
    %203 = arith.negf %202 : vector<2x128xf32>
    %204 = math.exp %203 : vector<2x128xf32>
    %cst_43 = arith.constant 1.000000e+00 : f32
    %205 = vector.broadcast %cst_43 : f32 to vector<2x128xf32>
    %206 = arith.addf %205, %204 : vector<2x128xf32>
    %207 = arith.divf %205, %206 : vector<2x128xf32>
    %208 = arith.mulf %199, %180 : vector<2x128xf32>
    %209 = arith.mulf %193, %201 : vector<2x128xf32>
    %210 = arith.addf %208, %209 : vector<2x128xf32>
    %211 = math.tanh %210 : vector<2x128xf32>
    %212 = arith.mulf %207, %211 : vector<2x128xf32>
    %c7_i32 = arith.constant 7 : i32
    %cst_44 = arith.constant dense<0.000000e+00> : vector<2x512xf32>
    %213 = tpu.matmul %212, %0, %cst_44 {dimension_numbers = #tpu.dot_dimension_numbers<[1], [0], [0], [1], [0, 0, 1, 1], [], []>} : vector<2x128xf32>, vector<128x512xf32>, vector<2x512xf32> -> vector<2x512xf32>
    %214 = arith.index_cast %c7_i32 : i32 to index
    %c0_45 = arith.constant 0 : index
    %c0_46 = arith.constant 0 : index
    %215 = vector.load %arg0[%214, %c0_45, %c0_46] : memref<8x2x512xf32, #tpu.memory_space<vmem>>, vector<1x2x512xf32>
    %216 = vector.shape_cast %215 : vector<1x2x512xf32> to vector<2x512xf32>
    %217 = arith.addf %213, %216 : vector<2x512xf32>
    %218 = vector.extract_strided_slice %217 {offsets = [0, 0], sizes = [2, 128], strides = [1, 1]} : vector<2x512xf32> to vector<2x128xf32>
    %219 = arith.negf %218 : vector<2x128xf32>
    %220 = math.exp %219 : vector<2x128xf32>
    %cst_47 = arith.constant 1.000000e+00 : f32
    %221 = vector.broadcast %cst_47 : f32 to vector<2x128xf32>
    %222 = arith.addf %221, %220 : vector<2x128xf32>
    %223 = arith.divf %221, %222 : vector<2x128xf32>
    %224 = vector.extract_strided_slice %217 {offsets = [0, 128], sizes = [2, 128], strides = [1, 1]} : vector<2x512xf32> to vector<2x128xf32>
    %225 = arith.negf %224 : vector<2x128xf32>
    %226 = math.exp %225 : vector<2x128xf32>
    %cst_48 = arith.constant 1.000000e+00 : f32
    %227 = vector.broadcast %cst_48 : f32 to vector<2x128xf32>
    %228 = arith.addf %227, %226 : vector<2x128xf32>
    %229 = arith.divf %227, %228 : vector<2x128xf32>
    %230 = vector.extract_strided_slice %217 {offsets = [0, 256], sizes = [2, 128], strides = [1, 1]} : vector<2x512xf32> to vector<2x128xf32>
    %231 = math.tanh %230 : vector<2x128xf32>
    %232 = vector.extract_strided_slice %217 {offsets = [0, 384], sizes = [2, 128], strides = [1, 1]} : vector<2x512xf32> to vector<2x128xf32>
    %233 = arith.negf %232 : vector<2x128xf32>
    %234 = math.exp %233 : vector<2x128xf32>
    %cst_49 = arith.constant 1.000000e+00 : f32
    %235 = vector.broadcast %cst_49 : f32 to vector<2x128xf32>
    %236 = arith.addf %235, %234 : vector<2x128xf32>
    %237 = arith.divf %235, %236 : vector<2x128xf32>
    %238 = arith.mulf %229, %210 : vector<2x128xf32>
    %239 = arith.mulf %223, %231 : vector<2x128xf32>
    %240 = arith.addf %238, %239 : vector<2x128xf32>
    %241 = math.tanh %240 : vector<2x128xf32>
    %242 = arith.mulf %237, %241 : vector<2x128xf32>
    %c8_i32 = arith.constant 8 : i32
    %c0_50 = arith.constant 0 : index
    %c0_51 = arith.constant 0 : index
    %243 = vector.load %arg2[%c0_50, %c0_51] : memref<1x128xf32, #tpu.memory_space<vmem>>, vector<1x128xf32>
    %244 = vector.broadcast %243 : vector<1x128xf32> to vector<2x128xf32>
    %245 = arith.mulf %242, %244 : vector<2x128xf32>
    %cst_52 = arith.constant dense<0.000000e+00> : vector<2xf32>
    %246 = vector.multi_reduction <add>, %245, %cst_52 [1] : vector<2x128xf32> to vector<2xf32>
    %247 = vector.shape_cast %246 : vector<2xf32> to vector<2x1xf32>
    %c0_53 = arith.constant 0 : index
    %c0_54 = arith.constant 0 : index
    %248 = vector.load %arg3[%c0_53, %c0_54] : memref<1x1xf32, #tpu.memory_space<vmem>>, vector<1x1xf32>
    %249 = vector.broadcast %248 : vector<1x1xf32> to vector<2x1xf32>
    %250 = arith.addf %247, %249 : vector<2x1xf32>
    %251 = arith.negf %250 : vector<2x1xf32>
    %252 = math.exp %251 : vector<2x1xf32>
    %cst_55 = arith.constant 1.000000e+00 : f32
    %253 = vector.broadcast %cst_55 : f32 to vector<2x1xf32>
    %254 = arith.addf %253, %252 : vector<2x1xf32>
    %255 = arith.divf %253, %254 : vector<2x1xf32>
    %c0_56 = arith.constant 0 : index
    %c0_57 = arith.constant 0 : index
    %256 = vector.load %arg4[%c0_56, %c0_57] : memref<2x1xf32, #tpu.memory_space<vmem>>, vector<2x1xf32>
    tpu.vector_store %arg4[%c0_56, %c0_57], %255 {strides = array<i32>} : memref<2x1xf32, #tpu.memory_space<vmem>>, vector<2x1xf32>,
    return
  }
}

</mosaic_0001>

<llo_original>
// kernel: tpu_custom_call.1
$region0: #{tpu_custom_call.1}
  #allocation0 [shape = 'u32[]', space=smem, size = 0x4, offset = 0x4, fixed_abs, tag = 'smem constant byte address 0x4 - core index']
  #allocation1 [shape = 'u32[144,128]{1,0:T(1,128)}', space=vmem, size = 0x12000, scoped, tag = 'internal scratch']
  #allocation2 [shape = 'f32[1,1]{1,0:T(1,128)S(1)}', space=vmem, size = 0x200, scoped, tag = 'scoped memory for tpu_custom_call.1']
  %s0 = inlined_call_operand.hbm [shape: f32[8,2,512], index: 0, kind: input, shape index: {}]
  %s1 = inlined_call_operand.hbm [shape: f32[128,512], index: 1, kind: input, shape index: {}]
  %s2 = inlined_call_operand.vmem [shape: f32[1,128], index: 2, kind: input, shape index: {}]
  %s3 = inlined_call_operand.<no memory space> [shape: f32[1,1], index: 3, kind: input, shape index: {}]
  %s4 = inlined_call_operand.vmem [shape: f32[2,1], index: 4, kind: output, shape index: {}]
  %s5 = sld [smem:[#allocation0]]
  $region34: #{tpu_custom_call.1} parent=0
    _
  %s7 = ssub.s32 1, %s5
  %s8 = scalar_select 0, %s7, %s5
  %v9 = vstv %s3
  %10 = vst [vmem:[#allocation2] sm:$0x1] %v9
  $region1: #{tpu_custom_call.1} parent=0
    #allocation3 [shape = 'u8[32768]{0}', space=vmem, size = 0x8000, scoped, tag = 'input window, operand 0, single buffered']
    #allocation4 [shape = 's32[1]{0}', space=sflag, size = 0x4, scoped, tag = 'scoped memory for tpu_custom_call.1']
    #allocation5 [shape = 'u8[262144]{0}', space=vmem, size = 0x40000, scoped, tag = 'input window, operand 1, single buffered']
    #allocation6 [shape = 's32[1]{0}', space=sflag, size = 0x4, scoped, tag = 'scoped memory for tpu_custom_call.1']
    %11 = vsyncpa [#allocation4], 0
    %12 = vsyncpa [#allocation6], 0
    // Predicated region
    $region2: #{tpu_custom_call.1} parent=1 // pred_check
      _
    $region3: #{tpu_custom_call.1} parent=1 // pred_check_branch
      %14 = sbr.rel (0) target = $region5
    $region4: #{tpu_custom_call.1} parent=1 // pred_region
      %s16 = ssub.s32 1024, 1024
      %17 = vsyncadd [#allocation4], %s16
      %s18 = sshll.u32 [#allocation3], 4
      %s19 = int_to_ptr.vmem [resolvable:$true] %s18
      %24 = dma.hbm_to_vmem [thread:$0]  %s0, 1024, %s19, [#allocation4], 128, 128, 8
    $region5: #{tpu_custom_call.1} parent=1 // pred_fallthru
      _
    // Predicated region
    $region6: #{tpu_custom_call.1} parent=1 // pred_check
      _
    $region7: #{tpu_custom_call.1} parent=1 // pred_check_branch
      %26 = sbr.rel (0) target = $region9
    $region8: #{tpu_custom_call.1} parent=1 // pred_region
      %s28 = ssub.s32 8192, 8192
      %29 = vsyncadd [#allocation6], %s28
      %s30 = sshll.u32 [#allocation5], 4
      %s31 = int_to_ptr.vmem [resolvable:$true] %s30
      %36 = dma.hbm_to_vmem [thread:$0]  %s1, 8192, %s31, [#allocation6], 512, 512, 32
    $region9: #{tpu_custom_call.1} parent=1 // pred_fallthru
      _
    // Predicated region
    $region10: #{tpu_custom_call.1} parent=1 // pred_check
      _
    $region11: #{tpu_custom_call.1} parent=1 // pred_check_branch
      %38 = sbr.rel (0) target = $region13
    $region12: #{tpu_custom_call.1} parent=1 // pred_region
      _
    $region13: #{tpu_custom_call.1} parent=1 // pred_fallthru
      _
    // Predicated region
    $region14: #{tpu_custom_call.1} parent=1 // pred_check
      _
    $region15: #{tpu_custom_call.1} parent=1 // pred_check_branch
      %40 = sbr.rel (0) target = $region17
    $region16: #{tpu_custom_call.1} parent=1 // pred_region
      _
    $region17: #{tpu_custom_call.1} parent=1 // pred_fallthru
      _
    // Predicated region
    $region18: #{tpu_custom_call.1} parent=1 // pred_check
      _
    $region19: #{tpu_custom_call.1} parent=1 // pred_check_branch
      %42 = sbr.rel (0) target = $region21
    $region20: #{tpu_custom_call.1} parent=1 // pred_region
      %43 = dma.done [#allocation4], 1024
    $region21: #{tpu_custom_call.1} parent=1 // pred_fallthru
      _
    // Predicated region
    $region22: #{tpu_custom_call.1} parent=1 // pred_check
      _
    $region23: #{tpu_custom_call.1} parent=1 // pred_check_branch
      %45 = sbr.rel (0) target = $region25
    $region24: #{tpu_custom_call.1} parent=1 // pred_region
      %46 = dma.done [#allocation6], 8192
    $region25: #{tpu_custom_call.1} parent=1 // pred_fallthru
      _
    %v47 = vld [vmem:[#allocation5] sm:$0xff]
    %v48 = vld [vmem:[#allocation5 + $0x8] sm:$0xff]
    %v49 = vld [vmem:[#allocation5 + $0x10] sm:$0xff]
    %v50 = vld [vmem:[#allocation5 + $0x18] sm:$0xff]
    %v51 = vld [vmem:[#allocation5 + $0x20] sm:$0xff]
    %v52 = vld [vmem:[#allocation5 + $0x28] sm:$0xff]
    %v53 = vld [vmem:[#allocation5 + $0x30] sm:$0xff]
    %v54 = vld [vmem:[#allocation5 + $0x38] sm:$0xff]
    %v55 = vld [vmem:[#allocation5 + $0x40] sm:$0xff]
    %v56 = vld [vmem:[#allocation5 + $0x48] sm:$0xff]
    %v57 = vld [vmem:[#allocation5 + $0x50] sm:$0xff]
    %v58 = vld [vmem:[#allocation5 + $0x58] sm:$0xff]
    %v59 = vld [vmem:[#allocation5 + $0x60] sm:$0xff]
    %v60 = vld [vmem:[#allocation5 + $0x68] sm:$0xff]
    %v61 = vld [vmem:[#allocation5 + $0x70] sm:$0xff]
    %v62 = vld [vmem:[#allocation5 + $0x78] sm:$0xff]
    %v63 = vld [vmem:[#allocation5 + $0x80] sm:$0xff]
    %v64 = vld [vmem:[#allocation5 + $0x88] sm:$0xff]
    %v65 = vld [vmem:[#allocation5 + $0x90] sm:$0xff]
    %v66 = vld [vmem:[#allocation5 + $0x98] sm:$0xff]
    %v67 = vld [vmem:[#allocation5 + $0xa0] sm:$0xff]
    %v68 = vld [vmem:[#allocation5 + $0xa8] sm:$0xff]
    %v69 = vld [vmem:[#allocation5 + $0xb0] sm:$0xff]
    %v70 = vld [vmem:[#allocation5 + $0xb8] sm:$0xff]
    %v71 = vld [vmem:[#allocation5 + $0xc0] sm:$0xff]
    %v72 = vld [vmem:[#allocation5 + $0xc8] sm:$0xff]
    %v73 = vld [vmem:[#allocation5 + $0xd0] sm:$0xff]
    %v74 = vld [vmem:[#allocation5 + $0xd8] sm:$0xff]
    %v75 = vld [vmem:[#allocation5 + $0xe0] sm:$0xff]
    %v76 = vld [vmem:[#allocation5 + $0xe8] sm:$0xff]
    %v77 = vld [vmem:[#allocation5 + $0xf0] sm:$0xff]
    %v78 = vld [vmem:[#allocation5 + $0xf8] sm:$0xff]
    %v79 = vld [vmem:[#allocation5 + $0x100] sm:$0xff]
    %v80 = vld [vmem:[#allocation5 + $0x108] sm:$0xff]
    %v81 = vld [vmem:[#allocation5 + $0x110] sm:$0xff]
    %v82 = vld [vmem:[#allocation5 + $0x118] sm:$0xff]
    %v83 = vld [vmem:[#allocation5 + $0x120] sm:$0xff]
    %v84 = vld [vmem:[#allocation5 + $0x128] sm:$0xff]
    %v85 = vld [vmem:[#allocation5 + $0x130] sm:$0xff]
    %v86 = vld [vmem:[#allocation5 + $0x138] sm:$0xff]
    %v87 = vld [vmem:[#allocation5 + $0x140] sm:$0xff]
    %v88 = vld [vmem:[#allocation5 + $0x148] sm:$0xff]
    %v89 = vld [vmem:[#allocation5 + $0x150] sm:$0xff]
    %v90 = vld [vmem:[#allocation5 + $0x158] sm:$0xff]
    %v91 = vld [vmem:[#allocation5 + $0x160] sm:$0xff]
    %v92 = vld [vmem:[#allocation5 + $0x168] sm:$0xff]
    %v93 = vld [vmem:[#allocation5 + $0x170] sm:$0xff]
    %v94 = vld [vmem:[#allocation5 + $0x178] sm:$0xff]
    %v95 = vld [vmem:[#allocation5 + $0x180] sm:$0xff]
    %v96 = vld [vmem:[#allocation5 + $0x188] sm:$0xff]
    %v97 = vld [vmem:[#allocation5 + $0x190] sm:$0xff]
    %v98 = vld [vmem:[#allocation5 + $0x198] sm:$0xff]
    %v99 = vld [vmem:[#allocation5 + $0x1a0] sm:$0xff]
    %v100 = vld [vmem:[#allocation5 + $0x1a8] sm:$0xff]
    %v101 = vld [vmem:[#allocation5 + $0x1b0] sm:$0xff]
    %v102 = vld [vmem:[#allocation5 + $0x1b8] sm:$0xff]
    %v103 = vld [vmem:[#allocation5 + $0x1c0] sm:$0xff]
    %v104 = vld [vmem:[#allocation5 + $0x1c8] sm:$0xff]
    %v105 = vld [vmem:[#allocation5 + $0x1d0] sm:$0xff]
    %v106 = vld [vmem:[#allocation5 + $0x1d8] sm:$0xff]
    %v107 = vld [vmem:[#allocation5 + $0x1e0] sm:$0xff]
    %v108 = vld [vmem:[#allocation5 + $0x1e8] sm:$0xff]
    %v109 = vld [vmem:[#allocation5 + $0x1f0] sm:$0xff]
    %v110 = vld [vmem:[#allocation5 + $0x1f8] sm:$0xff]
    %v111 = vld [vmem:[#allocation3] sm:$0xff]
    %v113 = vcombine.high %v111, %v111
    %v115 = vunpack.c.l.s4 1983009808
    %v116 = vunpack.c.0.s8 %v115
    %v117 = vlaneseq
    %v118 = vshrl.u32 %v117, 7
    %v119 = vsub.s32 %v116, %v118
    %v120 = vrot.slane %v111, %v119
    %v122 = vunpack.c.l.s4 1983009808
    %v123 = vunpack.c.0.s8 %v122
    %v124 = vlaneseq
    %v125 = vshrl.u32 %v124, 7
    %v126 = vsub.s32 %v123, %v125
    %v127 = vrot.slane %v113, %v126
    %v128 = vcombine.high %v120, %v120
    %v129 = vcombine.high %v127, %v127
    %134 = vmatprep.subr.mxu0 %v48
    %135 = vmatpush1.msra.mxu0 %v47
    %136 = vmatprep.subr.mxu0 %v52
    %137 = vmatpush1.msra.mxu0 %v51
    %138 = vmatprep.subr.mxu0 %v56
    %139 = vmatpush1.msra.mxu0 %v55
    %140 = vmatprep.subr.mxu0 %v60
    %141 = vmatpush1.msra.mxu0 %v59
    %142 = vmatprep.subr.mxu0 %v64
    %143 = vmatpush1.msra.mxu0 %v63
    %144 = vmatprep.subr.mxu0 %v68
    %145 = vmatpush1.msra.mxu0 %v67
    %146 = vmatprep.subr.mxu0 %v72
    %147 = vmatpush1.msra.mxu0 %v71
    %148 = vmatprep.subr.mxu0 %v76
    %149 = vmatpush1.msra.mxu0 %v75
    %150 = vmatprep.subr.mxu0 %v80
    %151 = vmatpush1.msra.mxu0 %v79
    %152 = vmatprep.subr.mxu0 %v84
    %153 = vmatpush1.msra.mxu0 %v83
    %154 = vmatprep.subr.mxu0 %v88
    %155 = vmatpush1.msra.mxu0 %v87
    %156 = vmatprep.subr.mxu0 %v92
    %157 = vmatpush1.msra.mxu0 %v91
    %158 = vmatprep.subr.mxu0 %v96
    %159 = vmatpush1.msra.mxu0 %v95
    %160 = vmatprep.subr.mxu0 %v100
    %161 = vmatpush1.msra.mxu0 %v99
    %162 = vmatprep.subr.mxu0 %v104
    %163 = vmatpush1.msra.mxu0 %v103
    %164 = vmatprep.subr.mxu0 %v108
    %165 = vmatpush1.msra.mxu0 %v107
    %166 = vmatprep.subr.mxu0 0.0
    %167 = vmatpush1.msra.mxu0 0.0
    %168 = vmatprep.subr.mxu0 0.0
    %169 = vmatpush1.msra.mxu0 0.0
    %170 = vmatprep.subr.mxu0 0.0
    %171 = vmatpush1.msra.mxu0 0.0
    %172 = vmatprep.subr.mxu0 0.0
    %173 = vmatpush1.msra.mxu0 0.0
    %174 = vmatprep.subr.mxu0 0.0
    %175 = vmatpush1.msra.mxu0 0.0
    %176 = vmatprep.subr.mxu0 0.0
    %177 = vmatpush1.msra.mxu0 0.0
    %178 = vmatprep.subr.mxu0 0.0
    %179 = vmatpush1.msra.mxu0 0.0
    %180 = vmatprep.subr.mxu0 0.0
    %181 = vmatpush1.msra.mxu0 0.0
    %182 = vmatprep.subr.mxu0 0.0
    %183 = vmatpush1.msra.mxu0 0.0
    %184 = vmatprep.subr.mxu0 0.0
    %185 = vmatpush1.msra.mxu0 0.0
    %186 = vmatprep.subr.mxu0 0.0
    %187 = vmatpush1.msra.mxu0 0.0
    %188 = vmatprep.subr.mxu0 0.0
    %189 = vmatpush1.msra.mxu0 0.0
    %190 = vmatprep.subr.mxu0 0.0
    %191 = vmatpush1.msra.mxu0 0.0
    %192 = vmatprep.subr.mxu0 0.0
    %193 = vmatpush1.msra.mxu0 0.0
    %194 = vmatprep.subr.mxu0 0.0
    %195 = vmatpush1.msra.mxu0 0.0
    %196 = vmatprep.subr.mxu0 0.0
    %197 = vmatpush1.msra.mxu0 0.0
    %198 = vmatprep.mubr.f32.mxu0 0.0
    %199 = vmatmul.mubr.f32.gmra.mrb[0].mxu0 0.0
    %v200 = vpop.f32.mrb[0].mxu0
    %v201 = vadd.f32 %v120, %v200
    %v202 = vpop.f32.mrb[0].mxu0
    %v203 = vadd.f32 %v128, %v202
    %204 = vdwg.mxu0
    %205 = vmatprep.subr.mxu0 %v50
    %206 = vmatpush1.msra.mxu0 %v49
    %207 = vmatprep.subr.mxu0 %v54
    %208 = vmatpush1.msra.mxu0 %v53
    %209 = vmatprep.subr.mxu0 %v58
    %210 = vmatpush1.msra.mxu0 %v57
    %211 = vmatprep.subr.mxu0 %v62
    %212 = vmatpush1.msra.mxu0 %v61
    %213 = vmatprep.subr.mxu0 %v66
    %214 = vmatpush1.msra.mxu0 %v65
    %215 = vmatprep.subr.mxu0 %v70
    %216 = vmatpush1.msra.mxu0 %v69
    %217 = vmatprep.subr.mxu0 %v74
    %218 = vmatpush1.msra.mxu0 %v73
    %219 = vmatprep.subr.mxu0 %v78
    %220 = vmatpush1.msra.mxu0 %v77
    %221 = vmatprep.subr.mxu0 %v82
    %222 = vmatpush1.msra.mxu0 %v81
    %223 = vmatprep.subr.mxu0 %v86
    %224 = vmatpush1.msra.mxu0 %v85
    %225 = vmatprep.subr.mxu0 %v90
    %226 = vmatpush1.msra.mxu0 %v89
    %227 = vmatprep.subr.mxu0 %v94
    %228 = vmatpush1.msra.mxu0 %v93
    %229 = vmatprep.subr.mxu0 %v98
    %230 = vmatpush1.msra.mxu0 %v97
    %231 = vmatprep.subr.mxu0 %v102
    %232 = vmatpush1.msra.mxu0 %v101
    %233 = vmatprep.subr.mxu0 %v106
    %234 = vmatpush1.msra.mxu0 %v105
    %235 = vmatprep.subr.mxu0 %v110
    %236 = vmatpush1.msra.mxu0 %v109
    %237 = vmatprep.subr.mxu0 0.0
    %238 = vmatpush1.msra.mxu0 0.0
    %239 = vmatprep.subr.mxu0 0.0
    %240 = vmatpush1.msra.mxu0 0.0
    %241 = vmatprep.subr.mxu0 0.0
    %242 = vmatpush1.msra.mxu0 0.0
    %243 = vmatprep.subr.mxu0 0.0
    %244 = vmatpush1.msra.mxu0 0.0
    %245 = vmatprep.subr.mxu0 0.0
    %246 = vmatpush1.msra.mxu0 0.0
    %247 = vmatprep.subr.mxu0 0.0
    %248 = vmatpush1.msra.mxu0 0.0
    %249 = vmatprep.subr.mxu0 0.0
    %250 = vmatpush1.msra.mxu0 0.0
    %251 = vmatprep.subr.mxu0 0.0
    %252 = vmatpush1.msra.mxu0 0.0
    %253 = vmatprep.subr.mxu0 0.0
    %254 = vmatpush1.msra.mxu0 0.0
    %255 = vmatprep.subr.mxu0 0.0
    %256 = vmatpush1.msra.mxu0 0.0
    %257 = vmatprep.subr.mxu0 0.0
    %258 = vmatpush1.msra.mxu0 0.0
    %259 = vmatprep.subr.mxu0 0.0
    %260 = vmatpush1.msra.mxu0 0.0
    %261 = vmatprep.subr.mxu0 0.0
    %262 = vmatpush1.msra.mxu0 0.0
    %263 = vmatprep.subr.mxu0 0.0
    %264 = vmatpush1.msra.mxu0 0.0
    %265 = vmatprep.subr.mxu0 0.0
    %266 = vmatpush1.msra.mxu0 0.0
    %267 = vmatprep.subr.mxu0 0.0
    %268 = vmatpush1.msra.mxu0 0.0
    %269 = vmatprep.mubr.f32.mxu0 0.0
    %270 = vmatmul.mubr.f32.gmra.mrb[0].mxu0 0.0
    %v271 = vpop.f32.mrb[0].mxu0
    %v272 = vadd.f32 %v127, %v271
    %v273 = vpop.f32.mrb[0].mxu0
    %v274 = vadd.f32 %v129, %v273
    %275 = vdwg.mxu0
    %v276 = vxor.u32 %v201, 2147483648
    %v277 = vmul.f32 %v276, 1.442695
    %v278 = vpow.pop %v277
    %v279 = vadd.f32 %v278, 1.0
    %v280 = vrcp.pop %v279
    %v281 = vmul.f32 1.0, %v280
    %v282 = vxor.u32 %v203, 2147483648
    %v283 = vmul.f32 %v282, 1.442695
    %v284 = vpow.pop %v283
    %v285 = vadd.f32 %v284, 1.0
    %v286 = vrcp.pop %v285
    %v287 = vmul.f32 1.0, %v286
    %v288 = vtanh.pop %v272
    %v289 = vxor.u32 %v274, 2147483648
    %v290 = vmul.f32 %v289, 1.442695
    %v291 = vpow.pop %v290
    %v292 = vadd.f32 %v291, 1.0
    %v293 = vrcp.pop %v292
    %v294 = vmul.f32 1.0, %v293
    %v295 = vmul.f32 %v287, 0.0
    %v296 = vmul.f32 %v281, %v288
    %v297 = vadd.f32 %v295, %v296
    %v298 = vtanh.pop %v297
    %v299 = vmul.f32 %v294, %v298
    %s300 = scalar_lea.vmem [#allocation3], 8
    %v301 = vld [vmem:[%s300] sm:$0xff]
    %v303 = vcombine.high %v301, %v301
    %v305 = vunpack.c.l.s4 1983009808
    %v306 = vunpack.c.0.s8 %v305
    %v307 = vlaneseq
    %v308 = vshrl.u32 %v307, 7
    %v309 = vsub.s32 %v306, %v308
    %v310 = vrot.slane %v301, %v309
    %v312 = vunpack.c.l.s4 1983009808
    %v313 = vunpack.c.0.s8 %v312
    %v314 = vlaneseq
    %v315 = vshrl.u32 %v314, 7
    %v316 = vsub.s32 %v313, %v315
    %v317 = vrot.slane %v303, %v316
    %v318 = vcombine.high %v310, %v310
    %v319 = vcombine.high %v317, %v317
    %324 = vmatprep.subr.mxu0 %v48
    %325 = vmatpush1.msra.mxu0 %v47
    %326 = vmatprep.subr.mxu0 %v52
    %327 = vmatpush1.msra.mxu0 %v51
    %328 = vmatprep.subr.mxu0 %v56
    %329 = vmatpush1.msra.mxu0 %v55
    %330 = vmatprep.subr.mxu0 %v60
    %331 = vmatpush1.msra.mxu0 %v59
    %332 = vmatprep.subr.mxu0 %v64
    %333 = vmatpush1.msra.mxu0 %v63
    %334 = vmatprep.subr.mxu0 %v68
    %335 = vmatpush1.msra.mxu0 %v67
    %336 = vmatprep.subr.mxu0 %v72
    %337 = vmatpush1.msra.mxu0 %v71
    %338 = vmatprep.subr.mxu0 %v76
    %339 = vmatpush1.msra.mxu0 %v75
    %340 = vmatprep.subr.mxu0 %v80
    %341 = vmatpush1.msra.mxu0 %v79
    %342 = vmatprep.subr.mxu0 %v84
    %343 = vmatpush1.msra.mxu0 %v83
    %344 = vmatprep.subr.mxu0 %v88
    %345 = vmatpush1.msra.mxu0 %v87
    %346 = vmatprep.subr.mxu0 %v92
    %347 = vmatpush1.msra.mxu0 %v91
    %348 = vmatprep.subr.mxu0 %v96
    %349 = vmatpush1.msra.mxu0 %v95
    %350 = vmatprep.subr.mxu0 %v100
    %351 = vmatpush1.msra.mxu0 %v99
    %352 = vmatprep.subr.mxu0 %v104
    %353 = vmatpush1.msra.mxu0 %v103
    %354 = vmatprep.subr.mxu0 %v108
    %355 = vmatpush1.msra.mxu0 %v107
    %356 = vmatprep.subr.mxu0 0.0
    %357 = vmatpush1.msra.mxu0 0.0
    %358 = vmatprep.subr.mxu0 0.0
    %359 = vmatpush1.msra.mxu0 0.0
    %360 = vmatprep.subr.mxu0 0.0
    %361 = vmatpush1.msra.mxu0 0.0
    %362 = vmatprep.subr.mxu0 0.0
    %363 = vmatpush1.msra.mxu0 0.0
    %364 = vmatprep.subr.mxu0 0.0
    %365 = vmatpush1.msra.mxu0 0.0
    %366 = vmatprep.subr.mxu0 0.0
    %367 = vmatpush1.msra.mxu0 0.0
    %368 = vmatprep.subr.mxu0 0.0
    %369 = vmatpush1.msra.mxu0 0.0
    %370 = vmatprep.subr.mxu0 0.0
    %371 = vmatpush1.msra.mxu0 0.0
    %372 = vmatprep.subr.mxu0 0.0
    %373 = vmatpush1.msra.mxu0 0.0
    %374 = vmatprep.subr.mxu0 0.0
    %375 = vmatpush1.msra.mxu0 0.0
    %376 = vmatprep.subr.mxu0 0.0
    %377 = vmatpush1.msra.mxu0 0.0
    %378 = vmatprep.subr.mxu0 0.0
    %379 = vmatpush1.msra.mxu0 0.0
    %380 = vmatprep.subr.mxu0 0.0
    %381 = vmatpush1.msra.mxu0 0.0
    %382 = vmatprep.subr.mxu0 0.0
    %383 = vmatpush1.msra.mxu0 0.0
    %384 = vmatprep.subr.mxu0 0.0
    %385 = vmatpush1.msra.mxu0 0.0
    %386 = vmatprep.subr.mxu0 0.0
    %387 = vmatpush1.msra.mxu0 0.0
    %388 = vmatprep.mubr.f32.mxu0 0.0
    %389 = vmatmul.mubr.f32.gmra.mrb[0].mxu0 %v299
    %v390 = vpop.f32.mrb[0].mxu0
    %v391 = vadd.f32 %v310, %v390
    %v392 = vpop.f32.mrb[0].mxu0
    %v393 = vadd.f32 %v318, %v392
    %394 = vdwg.mxu0
    %395 = vmatprep.subr.mxu0 %v50
    %396 = vmatpush1.msra.mxu0 %v49
    %397 = vmatprep.subr.mxu0 %v54
    %398 = vmatpush1.msra.mxu0 %v53
    %399 = vmatprep.subr.mxu0 %v58
    %400 = vmatpush1.msra.mxu0 %v57
    %401 = vmatprep.subr.mxu0 %v62
    %402 = vmatpush1.msra.mxu0 %v61
    %403 = vmatprep.subr.mxu0 %v66
    %404 = vmatpush1.msra.mxu0 %v65
    %405 = vmatprep.subr.mxu0 %v70
    %406 = vmatpush1.msra.mxu0 %v69
    %407 = vmatprep.subr.mxu0 %v74
    %408 = vmatpush1.msra.mxu0 %v73
    %409 = vmatprep.subr.mxu0 %v78
    %410 = vmatpush1.msra.mxu0 %v77
    %411 = vmatprep.subr.mxu0 %v82
    %412 = vmatpush1.msra.mxu0 %v81
    %413 = vmatprep.subr.mxu0 %v86
    %414 = vmatpush1.msra.mxu0 %v85
    %415 = vmatprep.subr.mxu0 %v90
    %416 = vmatpush1.msra.mxu0 %v89
    %417 = vmatprep.subr.mxu0 %v94
    %418 = vmatpush1.msra.mxu0 %v93
    %419 = vmatprep.subr.mxu0 %v98
    %420 = vmatpush1.msra.mxu0 %v97
    %421 = vmatprep.subr.mxu0 %v102
    %422 = vmatpush1.msra.mxu0 %v101
    %423 = vmatprep.subr.mxu0 %v106
    %424 = vmatpush1.msra.mxu0 %v105
    %425 = vmatprep.subr.mxu0 %v110
    %426 = vmatpush1.msra.mxu0 %v109
    %427 = vmatprep.subr.mxu0 0.0
    %428 = vmatpush1.msra.mxu0 0.0
    %429 = vmatprep.subr.mxu0 0.0
    %430 = vmatpush1.msra.mxu0 0.0
    %431 = vmatprep.subr.mxu0 0.0
    %432 = vmatpush1.msra.mxu0 0.0
    %433 = vmatprep.subr.mxu0 0.0
    %434 = vmatpush1.msra.mxu0 0.0
    %435 = vmatprep.subr.mxu0 0.0
    %436 = vmatpush1.msra.mxu0 0.0
    %437 = vmatprep.subr.mxu0 0.0
    %438 = vmatpush1.msra.mxu0 0.0
    %439 = vmatprep.subr.mxu0 0.0
    %440 = vmatpush1.msra.mxu0 0.0
    %441 = vmatprep.subr.mxu0 0.0
    %442 = vmatpush1.msra.mxu0 0.0
    %443 = vmatprep.subr.mxu0 0.0
    %444 = vmatpush1.msra.mxu0 0.0
    %445 = vmatprep.subr.mxu0 0.0
    %446 = vmatpush1.msra.mxu0 0.0
    %447 = vmatprep.subr.mxu0 0.0
    %448 = vmatpush1.msra.mxu0 0.0
    %449 = vmatprep.subr.mxu0 0.0
    %450 = vmatpush1.msra.mxu0 0.0
    %451 = vmatprep.subr.mxu0 0.0
    %452 = vmatpush1.msra.mxu0 0.0
    %453 = vmatprep.subr.mxu0 0.0
    %454 = vmatpush1.msra.mxu0 0.0
    %455 = vmatprep.subr.mxu0 0.0
    %456 = vmatpush1.msra.mxu0 0.0
    %457 = vmatprep.subr.mxu0 0.0
    %458 = vmatpush1.msra.mxu0 0.0
    %459 = vmatprep.mubr.f32.mxu0 0.0
    %460 = vmatmul.mubr.f32.gmra.mrb[0].mxu0 %v299
    %v461 = vpop.f32.mrb[0].mxu0
    %v462 = vadd.f32 %v317, %v461
    %v463 = vpop.f32.mrb[0].mxu0
    %v464 = vadd.f32 %v319, %v463
    %465 = vdwg.mxu0
    %v466 = vxor.u32 %v391, 2147483648
    %v467 = vmul.f32 %v466, 1.442695
    %v468 = vpow.pop %v467
    %v469 = vadd.f32 %v468, 1.0
    %v470 = vrcp.pop %v469
    %v471 = vmul.f32 1.0, %v470
    %v472 = vxor.u32 %v393, 2147483648
    %v473 = vmul.f32 %v472, 1.442695
    %v474 = vpow.pop %v473
    %v475 = vadd.f32 %v474, 1.0
    %v476 = vrcp.pop %v475
    %v477 = vmul.f32 1.0, %v476
    %v478 = vtanh.pop %v462
    %v479 = vxor.u32 %v464, 2147483648
    %v480 = vmul.f32 %v479, 1.442695
    %v481 = vpow.pop %v480
    %v482 = vadd.f32 %v481, 1.0
    %v483 = vrcp.pop %v482
    %v484 = vmul.f32 1.0, %v483
    %v485 = vmul.f32 %v477, %v297
    %v486 = vmul.f32 %v471, %v478
    %v487 = vadd.f32 %v485, %v486
    %v488 = vtanh.pop %v487
    %v489 = vmul.f32 %v484, %v488
    %s490 = scalar_lea.vmem [#allocation3], 16
    %v491 = vld [vmem:[%s490] sm:$0xff]
    %v493 = vcombine.high %v491, %v491
    %v495 = vunpack.c.l.s4 1983009808
    %v496 = vunpack.c.0.s8 %v495
    %v497 = vlaneseq
    %v498 = vshrl.u32 %v497, 7
    %v499 = vsub.s32 %v496, %v498
    %v500 = vrot.slane %v491, %v499
    %v502 = vunpack.c.l.s4 1983009808
    %v503 = vunpack.c.0.s8 %v502
    %v504 = vlaneseq
    %v505 = vshrl.u32 %v504, 7
    %v506 = vsub.s32 %v503, %v505
    %v507 = vrot.slane %v493, %v506
    %v508 = vcombine.high %v500, %v500
    %v509 = vcombine.high %v507, %v507
    %514 = vmatprep.subr.mxu0 %v48
    %515 = vmatpush1.msra.mxu0 %v47
    %516 = vmatprep.subr.mxu0 %v52
    %517 = vmatpush1.msra.mxu0 %v51
    %518 = vmatprep.subr.mxu0 %v56
    %519 = vmatpush1.msra.mxu0 %v55
    %520 = vmatprep.subr.mxu0 %v60
    %521 = vmatpush1.msra.mxu0 %v59
    %522 = vmatprep.subr.mxu0 %v64
    %523 = vmatpush1.msra.mxu0 %v63
    %524 = vmatprep.subr.mxu0 %v68
    %525 = vmatpush1.msra.mxu0 %v67
    %526 = vmatprep.subr.mxu0 %v72
    %527 = vmatpush1.msra.mxu0 %v71
    %528 = vmatprep.subr.mxu0 %v76
    %529 = vmatpush1.msra.mxu0 %v75
    %530 = vmatprep.subr.mxu0 %v80
    %531 = vmatpush1.msra.mxu0 %v79
    %532 = vmatprep.subr.mxu0 %v84
    %533 = vmatpush1.msra.mxu0 %v83
    %534 = vmatprep.subr.mxu0 %v88
    %535 = vmatpush1.msra.mxu0 %v87
    %536 = vmatprep.subr.mxu0 %v92
    %537 = vmatpush1.msra.mxu0 %v91
    %538 = vmatprep.subr.mxu0 %v96
    %539 = vmatpush1.msra.mxu0 %v95
    %540 = vmatprep.subr.mxu0 %v100
    %541 = vmatpush1.msra.mxu0 %v99
    %542 = vmatprep.subr.mxu0 %v104
    %543 = vmatpush1.msra.mxu0 %v103
    %544 = vmatprep.subr.mxu0 %v108
    %545 = vmatpush1.msra.mxu0 %v107
    %546 = vmatprep.subr.mxu0 0.0
    %547 = vmatpush1.msra.mxu0 0.0
    %548 = vmatprep.subr.mxu0 0.0
    %549 = vmatpush1.msra.mxu0 0.0
    %550 = vmatprep.subr.mxu0 0.0
    %551 = vmatpush1.msra.mxu0 0.0
    %552 = vmatprep.subr.mxu0 0.0
    %553 = vmatpush1.msra.mxu0 0.0
    %554 = vmatprep.subr.mxu0 0.0
    %555 = vmatpush1.msra.mxu0 0.0
    %556 = vmatprep.subr.mxu0 0.0
    %557 = vmatpush1.msra.mxu0 0.0
    %558 = vmatprep.subr.mxu0 0.0
    %559 = vmatpush1.msra.mxu0 0.0
    %560 = vmatprep.subr.mxu0 0.0
    %561 = vmatpush1.msra.mxu0 0.0
    %562 = vmatprep.subr.mxu0 0.0
    %563 = vmatpush1.msra.mxu0 0.0
    %564 = vmatprep.subr.mxu0 0.0
    %565 = vmatpush1.msra.mxu0 0.0
    %566 = vmatprep.subr.mxu0 0.0
    %567 = vmatpush1.msra.mxu0 0.0
    %568 = vmatprep.subr.mxu0 0.0
    %569 = vmatpush1.msra.mxu0 0.0
    %570 = vmatprep.subr.mxu0 0.0
    %571 = vmatpush1.msra.mxu0 0.0
    %572 = vmatprep.subr.mxu0 0.0
    %573 = vmatpush1.msra.mxu0 0.0
    %574 = vmatprep.subr.mxu0 0.0
    %575 = vmatpush1.msra.mxu0 0.0
    %576 = vmatprep.subr.mxu0 0.0
    %577 = vmatpush1.msra.mxu0 0.0
    %578 = vmatprep.mubr.f32.mxu0 0.0
    %579 = vmatmul.mubr.f32.gmra.mrb[0].mxu0 %v489
    %v580 = vpop.f32.mrb[0].mxu0
    %v581 = vadd.f32 %v500, %v580
    %v582 = vpop.f32.mrb[0].mxu0
    %v583 = vadd.f32 %v508, %v582
    %584 = vdwg.mxu0
    %585 = vmatprep.subr.mxu0 %v50
    %586 = vmatpush1.msra.mxu0 %v49
    %587 = vmatprep.subr.mxu0 %v54
    %588 = vmatpush1.msra.mxu0 %v53
    %589 = vmatprep.subr.mxu0 %v58
    %590 = vmatpush1.msra.mxu0 %v57
    %591 = vmatprep.subr.mxu0 %v62
    %592 = vmatpush1.msra.mxu0 %v61
    %593 = vmatprep.subr.mxu0 %v66
    %594 = vmatpush1.msra.mxu0 %v65
    %595 = vmatprep.subr.mxu0 %v70
    %596 = vmatpush1.msra.mxu0 %v69
    %597 = vmatprep.subr.mxu0 %v74
    %598 = vmatpush1.msra.mxu0 %v73
    %599 = vmatprep.subr.mxu0 %v78
    %600 = vmatpush1.msra.mxu0 %v77
    %601 = vmatprep.subr.mxu0 %v82
    %602 = vmatpush1.msra.mxu0 %v81
    %603 = vmatprep.subr.mxu0 %v86
    %604 = vmatpush1.msra.mxu0 %v85
    %605 = vmatprep.subr.mxu0 %v90
    %606 = vmatpush1.msra.mxu0 %v89
    %607 = vmatprep.subr.mxu0 %v94
    %608 = vmatpush1.msra.mxu0 %v93
    %609 = vmatprep.subr.mxu0 %v98
    %610 = vmatpush1.msra.mxu0 %v97
    %611 = vmatprep.subr.mxu0 %v102
    %612 = vmatpush1.msra.mxu0 %v101
    %613 = vmatprep.subr.mxu0 %v106
    %614 = vmatpush1.msra.mxu0 %v105
    %615 = vmatprep.subr.mxu0 %v110
    %616 = vmatpush1.msra.mxu0 %v109
    %617 = vmatprep.subr.mxu0 0.0
    %618 = vmatpush1.msra.mxu0 0.0
    %619 = vmatprep.subr.mxu0 0.0
    %620 = vmatpush1.msra.mxu0 0.0
    %621 = vmatprep.subr.mxu0 0.0
    %622 = vmatpush1.msra.mxu0 0.0
    %623 = vmatprep.subr.mxu0 0.0
    %624 = vmatpush1.msra.mxu0 0.0
    %625 = vmatprep.subr.mxu0 0.0
    %626 = vmatpush1.msra.mxu0 0.0
    %627 = vmatprep.subr.mxu0 0.0
    %628 = vmatpush1.msra.mxu0 0.0
    %629 = vmatprep.subr.mxu0 0.0
    %630 = vmatpush1.msra.mxu0 0.0
    %631 = vmatprep.subr.mxu0 0.0
    %632 = vmatpush1.msra.mxu0 0.0
    %633 = vmatprep.subr.mxu0 0.0
    %634 = vmatpush1.msra.mxu0 0.0
    %635 = vmatprep.subr.mxu0 0.0
    %636 = vmatpush1.msra.mxu0 0.0
    %637 = vmatprep.subr.mxu0 0.0
    %638 = vmatpush1.msra.mxu0 0.0
    %639 = vmatprep.subr.mxu0 0.0
    %640 = vmatpush1.msra.mxu0 0.0
    %641 = vmatprep.subr.mxu0 0.0
    %642 = vmatpush1.msra.mxu0 0.0
    %643 = vmatprep.subr.mxu0 0.0
    %644 = vmatpush1.msra.mxu0 0.0
    %645 = vmatprep.subr.mxu0 0.0
    %646 = vmatpush1.msra.mxu0 0.0
    %647 = vmatprep.subr.mxu0 0.0
    %648 = vmatpush1.msra.mxu0 0.0
    %649 = vmatprep.mubr.f32.mxu0 0.0
    %650 = vmatmul.mubr.f32.gmra.mrb[0].mxu0 %v489
    %v651 = vpop.f32.mrb[0].mxu0
    %v652 = vadd.f32 %v507, %v651
    %v653 = vpop.f32.mrb[0].mxu0
    %v654 = vadd.f32 %v509, %v653
    %655 = vdwg.mxu0
    %v656 = vxor.u32 %v581, 2147483648
    %v657 = vmul.f32 %v656, 1.442695
    %v658 = vpow.pop %v657
    %v659 = vadd.f32 %v658, 1.0
    %v660 = vrcp.pop %v659
    %v661 = vmul.f32 1.0, %v660
    %v662 = vxor.u32 %v583, 2147483648
    %v663 = vmul.f32 %v662, 1.442695
    %v664 = vpow.pop %v663
    %v665 = vadd.f32 %v664, 1.0
    %v666 = vrcp.pop %v665
    %v667 = vmul.f32 1.0, %v666
    %v668 = vtanh.pop %v652
    %v669 = vxor.u32 %v654, 2147483648
    %v670 = vmul.f32 %v669, 1.442695
    %v671 = vpow.pop %v670
    %v672 = vadd.f32 %v671, 1.0
    %v673 = vrcp.pop %v672
    %v674 = vmul.f32 1.0, %v673
    %v675 = vmul.f32 %v667, %v487
    %v676 = vmul.f32 %v661, %v668
    %v677 = vadd.f32 %v675, %v676
    %v678 = vtanh.pop %v677
    %v679 = vmul.f32 %v674, %v678
    %s680 = scalar_lea.vmem [#allocation3], 24
    %v681 = vld [vmem:[%s680] sm:$0xff]
    %v683 = vcombine.high %v681, %v681
    %v685 = vunpack.c.l.s4 1983009808
    %v686 = vunpack.c.0.s8 %v685
    %v687 = vlaneseq
    %v688 = vshrl.u32 %v687, 7
    %v689 = vsub.s32 %v686, %v688
    %v690 = vrot.slane %v681, %v689
    %v692 = vunpack.c.l.s4 1983009808
    %v693 = vunpack.c.0.s8 %v692
    %v694 = vlaneseq
    %v695 = vshrl.u32 %v694, 7
    %v696 = vsub.s32 %v693, %v695
    %v697 = vrot.slane %v683, %v696
    %v698 = vcombine.high %v690, %v690
    %v699 = vcombine.high %v697, %v697
    %704 = vmatprep.subr.mxu0 %v48
    %705 = vmatpush1.msra.mxu0 %v47
    %706 = vmatprep.subr.mxu0 %v52
    %707 = vmatpush1.msra.mxu0 %v51
    %708 = vmatprep.subr.mxu0 %v56
    %709 = vmatpush1.msra.mxu0 %v55
    %710 = vmatprep.subr.mxu0 %v60
    %711 = vmatpush1.msra.mxu0 %v59
    %712 = vmatprep.subr.mxu0 %v64
    %713 = vmatpush1.msra.mxu0 %v63
    %714 = vmatprep.subr.mxu0 %v68
    %715 = vmatpush1.msra.mxu0 %v67
    %716 = vmatprep.subr.mxu0 %v72
    %717 = vmatpush1.msra.mxu0 %v71
    %718 = vmatprep.subr.mxu0 %v76
    %719 = vmatpush1.msra.mxu0 %v75
    %720 = vmatprep.subr.mxu0 %v80
    %721 = vmatpush1.msra.mxu0 %v79
    %722 = vmatprep.subr.mxu0 %v84
    %723 = vmatpush1.msra.mxu0 %v83
    %724 = vmatprep.subr.mxu0 %v88
    %725 = vmatpush1.msra.mxu0 %v87
    %726 = vmatprep.subr.mxu0 %v92
    %727 = vmatpush1.msra.mxu0 %v91
    %728 = vmatprep.subr.mxu0 %v96
    %729 = vmatpush1.msra.mxu0 %v95
    %730 = vmatprep.subr.mxu0 %v100
    %731 = vmatpush1.msra.mxu0 %v99
    %732 = vmatprep.subr.mxu0 %v104
    %733 = vmatpush1.msra.mxu0 %v103
    %734 = vmatprep.subr.mxu0 %v108
    %735 = vmatpush1.msra.mxu0 %v107
    %736 = vmatprep.subr.mxu0 0.0
    %737 = vmatpush1.msra.mxu0 0.0
    %738 = vmatprep.subr.mxu0 0.0
    %739 = vmatpush1.msra.mxu0 0.0
    %740 = vmatprep.subr.mxu0 0.0
    %741 = vmatpush1.msra.mxu0 0.0
    %742 = vmatprep.subr.mxu0 0.0
    %743 = vmatpush1.msra.mxu0 0.0
    %744 = vmatprep.subr.mxu0 0.0
    %745 = vmatpush1.msra.mxu0 0.0
    %746 = vmatprep.subr.mxu0 0.0
    %747 = vmatpush1.msra.mxu0 0.0
    %748 = vmatprep.subr.mxu0 0.0
    %749 = vmatpush1.msra.mxu0 0.0
    %750 = vmatprep.subr.mxu0 0.0
    %751 = vmatpush1.msra.mxu0 0.0
    %752 = vmatprep.subr.mxu0 0.0
    %753 = vmatpush1.msra.mxu0 0.0
    %754 = vmatprep.subr.mxu0 0.0
    %755 = vmatpush1.msra.mxu0 0.0
    %756 = vmatprep.subr.mxu0 0.0
    %757 = vmatpush1.msra.mxu0 0.0
    %758 = vmatprep.subr.mxu0 0.0
    %759 = vmatpush1.msra.mxu0 0.0
    %760 = vmatprep.subr.mxu0 0.0
    %761 = vmatpush1.msra.mxu0 0.0
    %762 = vmatprep.subr.mxu0 0.0
    %763 = vmatpush1.msra.mxu0 0.0
    %764 = vmatprep.subr.mxu0 0.0
    %765 = vmatpush1.msra.mxu0 0.0
    %766 = vmatprep.subr.mxu0 0.0
    %767 = vmatpush1.msra.mxu0 0.0
    %768 = vmatprep.mubr.f32.mxu0 0.0
    %769 = vmatmul.mubr.f32.gmra.mrb[0].mxu0 %v679
    %v770 = vpop.f32.mrb[0].mxu0
    %v771 = vadd.f32 %v690, %v770
    %v772 = vpop.f32.mrb[0].mxu0
    %v773 = vadd.f32 %v698, %v772
    %774 = vdwg.mxu0
    %775 = vmatprep.subr.mxu0 %v50
    %776 = vmatpush1.msra.mxu0 %v49
    %777 = vmatprep.subr.mxu0 %v54
    %778 = vmatpush1.msra.mxu0 %v53
    %779 = vmatprep.subr.mxu0 %v58
    %780 = vmatpush1.msra.mxu0 %v57
    %781 = vmatprep.subr.mxu0 %v62
    %782 = vmatpush1.msra.mxu0 %v61
    %783 = vmatprep.subr.mxu0 %v66
    %784 = vmatpush1.msra.mxu0 %v65
    %785 = vmatprep.subr.mxu0 %v70
    %786 = vmatpush1.msra.mxu0 %v69
    %787 = vmatprep.subr.mxu0 %v74
    %788 = vmatpush1.msra.mxu0 %v73
    %789 = vmatprep.subr.mxu0 %v78
    %790 = vmatpush1.msra.mxu0 %v77
    %791 = vmatprep.subr.mxu0 %v82
    %792 = vmatpush1.msra.mxu0 %v81
    %793 = vmatprep.subr.mxu0 %v86
    %794 = vmatpush1.msra.mxu0 %v85
    %795 = vmatprep.subr.mxu0 %v90
    %796 = vmatpush1.msra.mxu0 %v89
    %797 = vmatprep.subr.mxu0 %v94
    %798 = vmatpush1.msra.mxu0 %v93
    %799 = vmatprep.subr.mxu0 %v98
    %800 = vmatpush1.msra.mxu0 %v97
    %801 = vmatprep.subr.mxu0 %v102
    %802 = vmatpush1.msra.mxu0 %v101
    %803 = vmatprep.subr.mxu0 %v106
    %804 = vmatpush1.msra.mxu0 %v105
    %805 = vmatprep.subr.mxu0 %v110
    %806 = vmatpush1.msra.mxu0 %v109
    %807 = vmatprep.subr.mxu0 0.0
    %808 = vmatpush1.msra.mxu0 0.0
    %809 = vmatprep.subr.mxu0 0.0
    %810 = vmatpush1.msra.mxu0 0.0
    %811 = vmatprep.subr.mxu0 0.0
    %812 = vmatpush1.msra.mxu0 0.0
    %813 = vmatprep.subr.mxu0 0.0
    %814 = vmatpush1.msra.mxu0 0.0
    %815 = vmatprep.subr.mxu0 0.0
    %816 = vmatpush1.msra.mxu0 0.0
    %817 = vmatprep.subr.mxu0 0.0
    %818 = vmatpush1.msra.mxu0 0.0
    %819 = vmatprep.subr.mxu0 0.0
    %820 = vmatpush1.msra.mxu0 0.0
    %821 = vmatprep.subr.mxu0 0.0
    %822 = vmatpush1.msra.mxu0 0.0
    %823 = vmatprep.subr.mxu0 0.0
    %824 = vmatpush1.msra.mxu0 0.0
    %825 = vmatprep.subr.mxu0 0.0
    %826 = vmatpush1.msra.mxu0 0.0
    %827 = vmatprep.subr.mxu0 0.0
    %828 = vmatpush1.msra.mxu0 0.0
    %829 = vmatprep.subr.mxu0 0.0
    %830 = vmatpush1.msra.mxu0 0.0
    %831 = vmatprep.subr.mxu0 0.0
    %832 = vmatpush1.msra.mxu0 0.0
    %833 = vmatprep.subr.mxu0 0.0
    %834 = vmatpush1.msra.mxu0 0.0
    %835 = vmatprep.subr.mxu0 0.0
    %836 = vmatpush1.msra.mxu0 0.0
    %837 = vmatprep.subr.mxu0 0.0
    %838 = vmatpush1.msra.mxu0 0.0
    %839 = vmatprep.mubr.f32.mxu0 0.0
    %840 = vmatmul.mubr.f32.gmra.mrb[0].mxu0 %v679
    %v841 = vpop.f32.mrb[0].mxu0
    %v842 = vadd.f32 %v697, %v841
    %v843 = vpop.f32.mrb[0].mxu0
    %v844 = vadd.f32 %v699, %v843
    %845 = vdwg.mxu0
    %v846 = vxor.u32 %v771, 2147483648
    %v847 = vmul.f32 %v846, 1.442695
    %v848 = vpow.pop %v847
    %v849 = vadd.f32 %v848, 1.0
    %v850 = vrcp.pop %v849
    %v851 = vmul.f32 1.0, %v850
    %v852 = vxor.u32 %v773, 2147483648
    %v853 = vmul.f32 %v852, 1.442695
    %v854 = vpow.pop %v853
    %v855 = vadd.f32 %v854, 1.0
    %v856 = vrcp.pop %v855
    %v857 = vmul.f32 1.0, %v856
    %v858 = vtanh.pop %v842
    %v859 = vxor.u32 %v844, 2147483648
    %v860 = vmul.f32 %v859, 1.442695
    %v861 = vpow.pop %v860
    %v862 = vadd.f32 %v861, 1.0
    %v863 = vrcp.pop %v862
    %v864 = vmul.f32 1.0, %v863
    %v865 = vmul.f32 %v857, %v677
    %v866 = vmul.f32 %v851, %v858
    %v867 = vadd.f32 %v865, %v866
    %v868 = vtanh.pop %v867
    %v869 = vmul.f32 %v864, %v868
    %s870 = scalar_lea.vmem [#allocation3], 32
    %v871 = vld [vmem:[%s870] sm:$0xff]
    %v873 = vcombine.high %v871, %v871
    %v875 = vunpack.c.l.s4 1983009808
    %v876 = vunpack.c.0.s8 %v875
    %v877 = vlaneseq
    %v878 = vshrl.u32 %v877, 7
    %v879 = vsub.s32 %v876, %v878
    %v880 = vrot.slane %v871, %v879
    %v882 = vunpack.c.l.s4 1983009808
    %v883 = vunpack.c.0.s8 %v882
    %v884 = vlaneseq
    %v885 = vshrl.u32 %v884, 7
    %v886 = vsub.s32 %v883, %v885
    %v887 = vrot.slane %v873, %v886
    %v888 = vcombine.high %v880, %v880
    %v889 = vcombine.high %v887, %v887
    %894 = vmatprep.subr.mxu0 %v48
    %895 = vmatpush1.msra.mxu0 %v47
    %896 = vmatprep.subr.mxu0 %v52
    %897 = vmatpush1.msra.mxu0 %v51
    %898 = vmatprep.subr.mxu0 %v56
    %899 = vmatpush1.msra.mxu0 %v55
    %900 = vmatprep.subr.mxu0 %v60
    %901 = vmatpush1.msra.mxu0 %v59
    %902 = vmatprep.subr.mxu0 %v64
    %903 = vmatpush1.msra.mxu0 %v63
    %904 = vmatprep.subr.mxu0 %v68
    %905 = vmatpush1.msra.mxu0 %v67
    %906 = vmatprep.subr.mxu0 %v72
    %907 = vmatpush1.msra.mxu0 %v71
    %908 = vmatprep.subr.mxu0 %v76
    %909 = vmatpush1.msra.mxu0 %v75
    %910 = vmatprep.subr.mxu0 %v80
    %911 = vmatpush1.msra.mxu0 %v79
    %912 = vmatprep.subr.mxu0 %v84
    %913 = vmatpush1.msra.mxu0 %v83
    %914 = vmatprep.subr.mxu0 %v88
    %915 = vmatpush1.msra.mxu0 %v87
    %916 = vmatprep.subr.mxu0 %v92
    %917 = vmatpush1.msra.mxu0 %v91
    %918 = vmatprep.subr.mxu0 %v96
    %919 = vmatpush1.msra.mxu0 %v95
    %920 = vmatprep.subr.mxu0 %v100
    %921 = vmatpush1.msra.mxu0 %v99
    %922 = vmatprep.subr.mxu0 %v104
    %923 = vmatpush1.msra.mxu0 %v103
    %924 = vmatprep.subr.mxu0 %v108
    %925 = vmatpush1.msra.mxu0 %v107
    %926 = vmatprep.subr.mxu0 0.0
    %927 = vmatpush1.msra.mxu0 0.0
    %928 = vmatprep.subr.mxu0 0.0
    %929 = vmatpush1.msra.mxu0 0.0
    %930 = vmatprep.subr.mxu0 0.0
    %931 = vmatpush1.msra.mxu0 0.0
    %932 = vmatprep.subr.mxu0 0.0
    %933 = vmatpush1.msra.mxu0 0.0
    %934 = vmatprep.subr.mxu0 0.0
    %935 = vmatpush1.msra.mxu0 0.0
    %936 = vmatprep.subr.mxu0 0.0
    %937 = vmatpush1.msra.mxu0 0.0
    %938 = vmatprep.subr.mxu0 0.0
    %939 = vmatpush1.msra.mxu0 0.0
    %940 = vmatprep.subr.mxu0 0.0
    %941 = vmatpush1.msra.mxu0 0.0
    %942 = vmatprep.subr.mxu0 0.0
    %943 = vmatpush1.msra.mxu0 0.0
    %944 = vmatprep.subr.mxu0 0.0
    %945 = vmatpush1.msra.mxu0 0.0
    %946 = vmatprep.subr.mxu0 0.0
    %947 = vmatpush1.msra.mxu0 0.0
    %948 = vmatprep.subr.mxu0 0.0
    %949 = vmatpush1.msra.mxu0 0.0
    %950 = vmatprep.subr.mxu0 0.0
    %951 = vmatpush1.msra.mxu0 0.0
    %952 = vmatprep.subr.mxu0 0.0
    %953 = vmatpush1.msra.mxu0 0.0
    %954 = vmatprep.subr.mxu0 0.0
    %955 = vmatpush1.msra.mxu0 0.0
    %956 = vmatprep.subr.mxu0 0.0
    %957 = vmatpush1.msra.mxu0 0.0
    %958 = vmatprep.mubr.f32.mxu0 0.0
    %959 = vmatmul.mubr.f32.gmra.mrb[0].mxu0 %v869
    %v960 = vpop.f32.mrb[0].mxu0
    %v961 = vadd.f32 %v880, %v960
    %v962 = vpop.f32.mrb[0].mxu0
    %v963 = vadd.f32 %v888, %v962
    %964 = vdwg.mxu0
    %965 = vmatprep.subr.mxu0 %v50
    %966 = vmatpush1.msra.mxu0 %v49
    %967 = vmatprep.subr.mxu0 %v54
    %968 = vmatpush1.msra.mxu0 %v53
    %969 = vmatprep.subr.mxu0 %v58
    %970 = vmatpush1.msra.mxu0 %v57
    %971 = vmatprep.subr.mxu0 %v62
    %972 = vmatpush1.msra.mxu0 %v61
    %973 = vmatprep.subr.mxu0 %v66
    %974 = vmatpush1.msra.mxu0 %v65
    %975 = vmatprep.subr.mxu0 %v70
    %976 = vmatpush1.msra.mxu0 %v69
    %977 = vmatprep.subr.mxu0 %v74
    %978 = vmatpush1.msra.mxu0 %v73
    %979 = vmatprep.subr.mxu0 %v78
    %980 = vmatpush1.msra.mxu0 %v77
    %981 = vmatprep.subr.mxu0 %v82
    %982 = vmatpush1.msra.mxu0 %v81
    %983 = vmatprep.subr.mxu0 %v86
    %984 = vmatpush1.msra.mxu0 %v85
    %985 = vmatprep.subr.mxu0 %v90
    %986 = vmatpush1.msra.mxu0 %v89
    %987 = vmatprep.subr.mxu0 %v94
    %988 = vmatpush1.msra.mxu0 %v93
    %989 = vmatprep.subr.mxu0 %v98
    %990 = vmatpush1.msra.mxu0 %v97
    %991 = vmatprep.subr.mxu0 %v102
    %992 = vmatpush1.msra.mxu0 %v101
    %993 = vmatprep.subr.mxu0 %v106
    %994 = vmatpush1.msra.mxu0 %v105
    %995 = vmatprep.subr.mxu0 %v110
    %996 = vmatpush1.msra.mxu0 %v109
    %997 = vmatprep.subr.mxu0 0.0
    %998 = vmatpush1.msra.mxu0 0.0
    %999 = vmatprep.subr.mxu0 0.0
    %1000 = vmatpush1.msra.mxu0 0.0
    %1001 = vmatprep.subr.mxu0 0.0
    %1002 = vmatpush1.msra.mxu0 0.0
    %1003 = vmatprep.subr.mxu0 0.0
    %1004 = vmatpush1.msra.mxu0 0.0
    %1005 = vmatprep.subr.mxu0 0.0
    %1006 = vmatpush1.msra.mxu0 0.0
    %1007 = vmatprep.subr.mxu0 0.0
    %1008 = vmatpush1.msra.mxu0 0.0
    %1009 = vmatprep.subr.mxu0 0.0
    %1010 = vmatpush1.msra.mxu0 0.0
    %1011 = vmatprep.subr.mxu0 0.0
    %1012 = vmatpush1.msra.mxu0 0.0
    %1013 = vmatprep.subr.mxu0 0.0
    %1014 = vmatpush1.msra.mxu0 0.0
    %1015 = vmatprep.subr.mxu0 0.0
    %1016 = vmatpush1.msra.mxu0 0.0
    %1017 = vmatprep.subr.mxu0 0.0
    %1018 = vmatpush1.msra.mxu0 0.0
    %1019 = vmatprep.subr.mxu0 0.0
    %1020 = vmatpush1.msra.mxu0 0.0
    %1021 = vmatprep.subr.mxu0 0.0
    %1022 = vmatpush1.msra.mxu0 0.0
    %1023 = vmatprep.subr.mxu0 0.0
    %1024 = vmatpush1.msra.mxu0 0.0
    %1025 = vmatprep.subr.mxu0 0.0
    %1026 = vmatpush1.msra.mxu0 0.0
    %1027 = vmatprep.subr.mxu0 0.0
    %1028 = vmatpush1.msra.mxu0 0.0
    %1029 = vmatprep.mubr.f32.mxu0 0.0
    %1030 = vmatmul.mubr.f32.gmra.mrb[0].mxu0 %v869
    %v1031 = vpop.f32.mrb[0].mxu0
    %v1032 = vadd.f32 %v887, %v1031
    %v1033 = vpop.f32.mrb[0].mxu0
    %v1034 = vadd.f32 %v889, %v1033
    %1035 = vdwg.mxu0
    %v1036 = vxor.u32 %v961, 2147483648
    %v1037 = vmul.f32 %v1036, 1.442695
    %v1038 = vpow.pop %v1037
    %v1039 = vadd.f32 %v1038, 1.0
    %v1040 = vrcp.pop %v1039
    %v1041 = vmul.f32 1.0, %v1040
    %v1042 = vxor.u32 %v963, 2147483648
    %v1043 = vmul.f32 %v1042, 1.442695
    %v1044 = vpow.pop %v1043
    %v1045 = vadd.f32 %v1044, 1.0
    %v1046 = vrcp.pop %v1045
    %v1047 = vmul.f32 1.0, %v1046
    %v1048 = vtanh.pop %v1032
    %v1049 = vxor.u32 %v1034, 2147483648
    %v1050 = vmul.f32 %v1049, 1.442695
    %v1051 = vpow.pop %v1050
    %v1052 = vadd.f32 %v1051, 1.0
    %v1053 = vrcp.pop %v1052
    %v1054 = vmul.f32 1.0, %v1053
    %v1055 = vmul.f32 %v1047, %v867
    %v1056 = vmul.f32 %v1041, %v1048
    %v1057 = vadd.f32 %v1055, %v1056
    %v1058 = vtanh.pop %v1057
    %v1059 = vmul.f32 %v1054, %v1058
    %s1060 = scalar_lea.vmem [#allocation3], 40
    %v1061 = vld [vmem:[%s1060] sm:$0xff]
    %v1063 = vcombine.high %v1061, %v1061
    %v1065 = vunpack.c.l.s4 1983009808
    %v1066 = vunpack.c.0.s8 %v1065
    %v1067 = vlaneseq
    %v1068 = vshrl.u32 %v1067, 7
    %v1069 = vsub.s32 %v1066, %v1068
    %v1070 = vrot.slane %v1061, %v1069
    %v1072 = vunpack.c.l.s4 1983009808
    %v1073 = vunpack.c.0.s8 %v1072
    %v1074 = vlaneseq
    %v1075 = vshrl.u32 %v1074, 7
    %v1076 = vsub.s32 %v1073, %v1075
    %v1077 = vrot.slane %v1063, %v1076
    %v1078 = vcombine.high %v1070, %v1070
    %v1079 = vcombine.high %v1077, %v1077
    %1084 = vmatprep.subr.mxu0 %v48
    %1085 = vmatpush1.msra.mxu0 %v47
    %1086 = vmatprep.subr.mxu0 %v52
    %1087 = vmatpush1.msra.mxu0 %v51
    %1088 = vmatprep.subr.mxu0 %v56
    %1089 = vmatpush1.msra.mxu0 %v55
    %1090 = vmatprep.subr.mxu0 %v60
    %1091 = vmatpush1.msra.mxu0 %v59
    %1092 = vmatprep.subr.mxu0 %v64
    %1093 = vmatpush1.msra.mxu0 %v63
    %1094 = vmatprep.subr.mxu0 %v68
    %1095 = vmatpush1.msra.mxu0 %v67
    %1096 = vmatprep.subr.mxu0 %v72
    %1097 = vmatpush1.msra.mxu0 %v71
    %1098 = vmatprep.subr.mxu0 %v76
    %1099 = vmatpush1.msra.mxu0 %v75
    %1100 = vmatprep.subr.mxu0 %v80
    %1101 = vmatpush1.msra.mxu0 %v79
    %1102 = vmatprep.subr.mxu0 %v84
    %1103 = vmatpush1.msra.mxu0 %v83
    %1104 = vmatprep.subr.mxu0 %v88
    %1105 = vmatpush1.msra.mxu0 %v87
    %1106 = vmatprep.subr.mxu0 %v92
    %1107 = vmatpush1.msra.mxu0 %v91
    %1108 = vmatprep.subr.mxu0 %v96
    %1109 = vmatpush1.msra.mxu0 %v95
    %1110 = vmatprep.subr.mxu0 %v100
    %1111 = vmatpush1.msra.mxu0 %v99
    %1112 = vmatprep.subr.mxu0 %v104
    %1113 = vmatpush1.msra.mxu0 %v103
    %1114 = vmatprep.subr.mxu0 %v108
    %1115 = vmatpush1.msra.mxu0 %v107
    %1116 = vmatprep.subr.mxu0 0.0
    %1117 = vmatpush1.msra.mxu0 0.0
    %1118 = vmatprep.subr.mxu0 0.0
    %1119 = vmatpush1.msra.mxu0 0.0
    %1120 = vmatprep.subr.mxu0 0.0
    %1121 = vmatpush1.msra.mxu0 0.0
    %1122 = vmatprep.subr.mxu0 0.0
    %1123 = vmatpush1.msra.mxu0 0.0
    %1124 = vmatprep.subr.mxu0 0.0
    %1125 = vmatpush1.msra.mxu0 0.0
    %1126 = vmatprep.subr.mxu0 0.0
    %1127 = vmatpush1.msra.mxu0 0.0
    %1128 = vmatprep.subr.mxu0 0.0
    %1129 = vmatpush1.msra.mxu0 0.0
    %1130 = vmatprep.subr.mxu0 0.0
    %1131 = vmatpush1.msra.mxu0 0.0
    %1132 = vmatprep.subr.mxu0 0.0
    %1133 = vmatpush1.msra.mxu0 0.0
    %1134 = vmatprep.subr.mxu0 0.0
    %1135 = vmatpush1.msra.mxu0 0.0
    %1136 = vmatprep.subr.mxu0 0.0
    %1137 = vmatpush1.msra.mxu0 0.0
    %1138 = vmatprep.subr.mxu0 0.0
    %1139 = vmatpush1.msra.mxu0 0.0
    %1140 = vmatprep.subr.mxu0 0.0
    %1141 = vmatpush1.msra.mxu0 0.0
    %1142 = vmatprep.subr.mxu0 0.0
    %1143 = vmatpush1.msra.mxu0 0.0
    %1144 = vmatprep.subr.mxu0 0.0
    %1145 = vmatpush1.msra.mxu0 0.0
    %1146 = vmatprep.subr.mxu0 0.0
    %1147 = vmatpush1.msra.mxu0 0.0
    %1148 = vmatprep.mubr.f32.mxu0 0.0
    %1149 = vmatmul.mubr.f32.gmra.mrb[0].mxu0 %v1059
    %v1150 = vpop.f32.mrb[0].mxu0
    %v1151 = vadd.f32 %v1070, %v1150
    %v1152 = vpop.f32.mrb[0].mxu0
    %v1153 = vadd.f32 %v1078, %v1152
    %1154 = vdwg.mxu0
    %1155 = vmatprep.subr.mxu0 %v50
    %1156 = vmatpush1.msra.mxu0 %v49
    %1157 = vmatprep.subr.mxu0 %v54
    %1158 = vmatpush1.msra.mxu0 %v53
    %1159 = vmatprep.subr.mxu0 %v58
    %1160 = vmatpush1.msra.mxu0 %v57
    %1161 = vmatprep.subr.mxu0 %v62
    %1162 = vmatpush1.msra.mxu0 %v61
    %1163 = vmatprep.subr.mxu0 %v66
    %1164 = vmatpush1.msra.mxu0 %v65
    %1165 = vmatprep.subr.mxu0 %v70
    %1166 = vmatpush1.msra.mxu0 %v69
    %1167 = vmatprep.subr.mxu0 %v74
    %1168 = vmatpush1.msra.mxu0 %v73
    %1169 = vmatprep.subr.mxu0 %v78
    %1170 = vmatpush1.msra.mxu0 %v77
    %1171 = vmatprep.subr.mxu0 %v82
    %1172 = vmatpush1.msra.mxu0 %v81
    %1173 = vmatprep.subr.mxu0 %v86
    %1174 = vmatpush1.msra.mxu0 %v85
    %1175 = vmatprep.subr.mxu0 %v90
    %1176 = vmatpush1.msra.mxu0 %v89
    %1177 = vmatprep.subr.mxu0 %v94
    %1178 = vmatpush1.msra.mxu0 %v93
    %1179 = vmatprep.subr.mxu0 %v98
    %1180 = vmatpush1.msra.mxu0 %v97
    %1181 = vmatprep.subr.mxu0 %v102
    %1182 = vmatpush1.msra.mxu0 %v101
    %1183 = vmatprep.subr.mxu0 %v106
    %1184 = vmatpush1.msra.mxu0 %v105
    %1185 = vmatprep.subr.mxu0 %v110
    %1186 = vmatpush1.msra.mxu0 %v109
    %1187 = vmatprep.subr.mxu0 0.0
    %1188 = vmatpush1.msra.mxu0 0.0
    %1189 = vmatprep.subr.mxu0 0.0
    %1190 = vmatpush1.msra.mxu0 0.0
    %1191 = vmatprep.subr.mxu0 0.0
    %1192 = vmatpush1.msra.mxu0 0.0
    %1193 = vmatprep.subr.mxu0 0.0
    %1194 = vmatpush1.msra.mxu0 0.0
    %1195 = vmatprep.subr.mxu0 0.0
    %1196 = vmatpush1.msra.mxu0 0.0
    %1197 = vmatprep.subr.mxu0 0.0
    %1198 = vmatpush1.msra.mxu0 0.0
    %1199 = vmatprep.subr.mxu0 0.0
    %1200 = vmatpush1.msra.mxu0 0.0
    %1201 = vmatprep.subr.mxu0 0.0
    %1202 = vmatpush1.msra.mxu0 0.0
    %1203 = vmatprep.subr.mxu0 0.0
    %1204 = vmatpush1.msra.mxu0 0.0
    %1205 = vmatprep.subr.mxu0 0.0
    %1206 = vmatpush1.msra.mxu0 0.0
    %1207 = vmatprep.subr.mxu0 0.0
    %1208 = vmatpush1.msra.mxu0 0.0
    %1209 = vmatprep.subr.mxu0 0.0
    %1210 = vmatpush1.msra.mxu0 0.0
    %1211 = vmatprep.subr.mxu0 0.0
    %1212 = vmatpush1.msra.mxu0 0.0
    %1213 = vmatprep.subr.mxu0 0.0
    %1214 = vmatpush1.msra.mxu0 0.0
    %1215 = vmatprep.subr.mxu0 0.0
    %1216 = vmatpush1.msra.mxu0 0.0
    %1217 = vmatprep.subr.mxu0 0.0
    %1218 = vmatpush1.msra.mxu0 0.0
    %1219 = vmatprep.mubr.f32.mxu0 0.0
    %1220 = vmatmul.mubr.f32.gmra.mrb[0].mxu0 %v1059
    %v1221 = vpop.f32.mrb[0].mxu0
    %v1222 = vadd.f32 %v1077, %v1221
    %v1223 = vpop.f32.mrb[0].mxu0
    %v1224 = vadd.f32 %v1079, %v1223
    %1225 = vdwg.mxu0
    %v1226 = vxor.u32 %v1151, 2147483648
    %v1227 = vmul.f32 %v1226, 1.442695
    %v1228 = vpow.pop %v1227
    %v1229 = vadd.f32 %v1228, 1.0
    %v1230 = vrcp.pop %v1229
    %v1231 = vmul.f32 1.0, %v1230
    %v1232 = vxor.u32 %v1153, 2147483648
    %v1233 = vmul.f32 %v1232, 1.442695
    %v1234 = vpow.pop %v1233
    %v1235 = vadd.f32 %v1234, 1.0
    %v1236 = vrcp.pop %v1235
    %v1237 = vmul.f32 1.0, %v1236
    %v1238 = vtanh.pop %v1222
    %v1239 = vxor.u32 %v1224, 2147483648
    %v1240 = vmul.f32 %v1239, 1.442695
    %v1241 = vpow.pop %v1240
    %v1242 = vadd.f32 %v1241, 1.0
    %v1243 = vrcp.pop %v1242
    %v1244 = vmul.f32 1.0, %v1243
    %v1245 = vmul.f32 %v1237, %v1057
    %v1246 = vmul.f32 %v1231, %v1238
    %v1247 = vadd.f32 %v1245, %v1246
    %v1248 = vtanh.pop %v1247
    %v1249 = vmul.f32 %v1244, %v1248
    %s1250 = scalar_lea.vmem [#allocation3], 48
    %v1251 = vld [vmem:[%s1250] sm:$0xff]
    %v1253 = vcombine.high %v1251, %v1251
    %v1255 = vunpack.c.l.s4 1983009808
    %v1256 = vunpack.c.0.s8 %v1255
    %v1257 = vlaneseq
    %v1258 = vshrl.u32 %v1257, 7
    %v1259 = vsub.s32 %v1256, %v1258
    %v1260 = vrot.slane %v1251, %v1259
    %v1262 = vunpack.c.l.s4 1983009808
    %v1263 = vunpack.c.0.s8 %v1262
    %v1264 = vlaneseq
    %v1265 = vshrl.u32 %v1264, 7
    %v1266 = vsub.s32 %v1263, %v1265
    %v1267 = vrot.slane %v1253, %v1266
    %v1268 = vcombine.high %v1260, %v1260
    %v1269 = vcombine.high %v1267, %v1267
    %1274 = vmatprep.subr.mxu0 %v48
    %1275 = vmatpush1.msra.mxu0 %v47
    %1276 = vmatprep.subr.mxu0 %v52
    %1277 = vmatpush1.msra.mxu0 %v51
    %1278 = vmatprep.subr.mxu0 %v56
    %1279 = vmatpush1.msra.mxu0 %v55
    %1280 = vmatprep.subr.mxu0 %v60
    %1281 = vmatpush1.msra.mxu0 %v59
    %1282 = vmatprep.subr.mxu0 %v64
    %1283 = vmatpush1.msra.mxu0 %v63
    %1284 = vmatprep.subr.mxu0 %v68
    %1285 = vmatpush1.msra.mxu0 %v67
    %1286 = vmatprep.subr.mxu0 %v72
    %1287 = vmatpush1.msra.mxu0 %v71
    %1288 = vmatprep.subr.mxu0 %v76
    %1289 = vmatpush1.msra.mxu0 %v75
    %1290 = vmatprep.subr.mxu0 %v80
    %1291 = vmatpush1.msra.mxu0 %v79
    %1292 = vmatprep.subr.mxu0 %v84
    %1293 = vmatpush1.msra.mxu0 %v83
    %1294 = vmatprep.subr.mxu0 %v88
    %1295 = vmatpush1.msra.mxu0 %v87
    %1296 = vmatprep.subr.mxu0 %v92
    %1297 = vmatpush1.msra.mxu0 %v91
    %1298 = vmatprep.subr.mxu0 %v96
    %1299 = vmatpush1.msra.mxu0 %v95
    %1300 = vmatprep.subr.mxu0 %v100
    %1301 = vmatpush1.msra.mxu0 %v99
    %1302 = vmatprep.subr.mxu0 %v104
    %1303 = vmatpush1.msra.mxu0 %v103
    %1304 = vmatprep.subr.mxu0 %v108
    %1305 = vmatpush1.msra.mxu0 %v107
    %1306 = vmatprep.subr.mxu0 0.0
    %1307 = vmatpush1.msra.mxu0 0.0
    %1308 = vmatprep.subr.mxu0 0.0
    %1309 = vmatpush1.msra.mxu0 0.0
    %1310 = vmatprep.subr.mxu0 0.0
    %1311 = vmatpush1.msra.mxu0 0.0
    %1312 = vmatprep.subr.mxu0 0.0
    %1313 = vmatpush1.msra.mxu0 0.0
    %1314 = vmatprep.subr.mxu0 0.0
    %1315 = vmatpush1.msra.mxu0 0.0
    %1316 = vmatprep.subr.mxu0 0.0
    %1317 = vmatpush1.msra.mxu0 0.0
    %1318 = vmatprep.subr.mxu0 0.0
    %1319 = vmatpush1.msra.mxu0 0.0
    %1320 = vmatprep.subr.mxu0 0.0
    %1321 = vmatpush1.msra.mxu0 0.0
    %1322 = vmatprep.subr.mxu0 0.0
    %1323 = vmatpush1.msra.mxu0 0.0
    %1324 = vmatprep.subr.mxu0 0.0
    %1325 = vmatpush1.msra.mxu0 0.0
    %1326 = vmatprep.subr.mxu0 0.0
    %1327 = vmatpush1.msra.mxu0 0.0
    %1328 = vmatprep.subr.mxu0 0.0
    %1329 = vmatpush1.msra.mxu0 0.0
    %1330 = vmatprep.subr.mxu0 0.0
    %1331 = vmatpush1.msra.mxu0 0.0
    %1332 = vmatprep.subr.mxu0 0.0
    %1333 = vmatpush1.msra.mxu0 0.0
    %1334 = vmatprep.subr.mxu0 0.0
    %1335 = vmatpush1.msra.mxu0 0.0
    %1336 = vmatprep.subr.mxu0 0.0
    %1337 = vmatpush1.msra.mxu0 0.0
    %1338 = vmatprep.mubr.f32.mxu0 0.0
    %1339 = vmatmul.mubr.f32.gmra.mrb[0].mxu0 %v1249
    %v1340 = vpop.f32.mrb[0].mxu0
    %v1341 = vadd.f32 %v1260, %v1340
    %v1342 = vpop.f32.mrb[0].mxu0
    %v1343 = vadd.f32 %v1268, %v1342
    %1344 = vdwg.mxu0
    %1345 = vmatprep.subr.mxu0 %v50
    %1346 = vmatpush1.msra.mxu0 %v49
    %1347 = vmatprep.subr.mxu0 %v54
    %1348 = vmatpush1.msra.mxu0 %v53
    %1349 = vmatprep.subr.mxu0 %v58
    %1350 = vmatpush1.msra.mxu0 %v57
    %1351 = vmatprep.subr.mxu0 %v62
    %1352 = vmatpush1.msra.mxu0 %v61
    %1353 = vmatprep.subr.mxu0 %v66
    %1354 = vmatpush1.msra.mxu0 %v65
    %1355 = vmatprep.subr.mxu0 %v70
    %1356 = vmatpush1.msra.mxu0 %v69
    %1357 = vmatprep.subr.mxu0 %v74
    %1358 = vmatpush1.msra.mxu0 %v73
    %1359 = vmatprep.subr.mxu0 %v78
    %1360 = vmatpush1.msra.mxu0 %v77
    %1361 = vmatprep.subr.mxu0 %v82
    %1362 = vmatpush1.msra.mxu0 %v81
    %1363 = vmatprep.subr.mxu0 %v86
    %1364 = vmatpush1.msra.mxu0 %v85
    %1365 = vmatprep.subr.mxu0 %v90
    %1366 = vmatpush1.msra.mxu0 %v89
    %1367 = vmatprep.subr.mxu0 %v94
    %1368 = vmatpush1.msra.mxu0 %v93
    %1369 = vmatprep.subr.mxu0 %v98
    %1370 = vmatpush1.msra.mxu0 %v97
    %1371 = vmatprep.subr.mxu0 %v102
    %1372 = vmatpush1.msra.mxu0 %v101
    %1373 = vmatprep.subr.mxu0 %v106
    %1374 = vmatpush1.msra.mxu0 %v105
    %1375 = vmatprep.subr.mxu0 %v110
    %1376 = vmatpush1.msra.mxu0 %v109
    %1377 = vmatprep.subr.mxu0 0.0
    %1378 = vmatpush1.msra.mxu0 0.0
    %1379 = vmatprep.subr.mxu0 0.0
    %1380 = vmatpush1.msra.mxu0 0.0
    %1381 = vmatprep.subr.mxu0 0.0
    %1382 = vmatpush1.msra.mxu0 0.0
    %1383 = vmatprep.subr.mxu0 0.0
    %1384 = vmatpush1.msra.mxu0 0.0
    %1385 = vmatprep.subr.mxu0 0.0
    %1386 = vmatpush1.msra.mxu0 0.0
    %1387 = vmatprep.subr.mxu0 0.0
    %1388 = vmatpush1.msra.mxu0 0.0
    %1389 = vmatprep.subr.mxu0 0.0
    %1390 = vmatpush1.msra.mxu0 0.0
    %1391 = vmatprep.subr.mxu0 0.0
    %1392 = vmatpush1.msra.mxu0 0.0
    %1393 = vmatprep.subr.mxu0 0.0
    %1394 = vmatpush1.msra.mxu0 0.0
    %1395 = vmatprep.subr.mxu0 0.0
    %1396 = vmatpush1.msra.mxu0 0.0
    %1397 = vmatprep.subr.mxu0 0.0
    %1398 = vmatpush1.msra.mxu0 0.0
    %1399 = vmatprep.subr.mxu0 0.0
    %1400 = vmatpush1.msra.mxu0 0.0
    %1401 = vmatprep.subr.mxu0 0.0
    %1402 = vmatpush1.msra.mxu0 0.0
    %1403 = vmatprep.subr.mxu0 0.0
    %1404 = vmatpush1.msra.mxu0 0.0
    %1405 = vmatprep.subr.mxu0 0.0
    %1406 = vmatpush1.msra.mxu0 0.0
    %1407 = vmatprep.subr.mxu0 0.0
    %1408 = vmatpush1.msra.mxu0 0.0
    %1409 = vmatprep.mubr.f32.mxu0 0.0
    %1410 = vmatmul.mubr.f32.gmra.mrb[0].mxu0 %v1249
    %v1411 = vpop.f32.mrb[0].mxu0
    %v1412 = vadd.f32 %v1267, %v1411
    %v1413 = vpop.f32.mrb[0].mxu0
    %v1414 = vadd.f32 %v1269, %v1413
    %1415 = vdwg.mxu0
    %v1416 = vxor.u32 %v1341, 2147483648
    %v1417 = vmul.f32 %v1416, 1.442695
    %v1418 = vpow.pop %v1417
    %v1419 = vadd.f32 %v1418, 1.0
    %v1420 = vrcp.pop %v1419
    %v1421 = vmul.f32 1.0, %v1420
    %v1422 = vxor.u32 %v1343, 2147483648
    %v1423 = vmul.f32 %v1422, 1.442695
    %v1424 = vpow.pop %v1423
    %v1425 = vadd.f32 %v1424, 1.0
    %v1426 = vrcp.pop %v1425
    %v1427 = vmul.f32 1.0, %v1426
    %v1428 = vtanh.pop %v1412
    %v1429 = vxor.u32 %v1414, 2147483648
    %v1430 = vmul.f32 %v1429, 1.442695
    %v1431 = vpow.pop %v1430
    %v1432 = vadd.f32 %v1431, 1.0
    %v1433 = vrcp.pop %v1432
    %v1434 = vmul.f32 1.0, %v1433
    %v1435 = vmul.f32 %v1427, %v1247
    %v1436 = vmul.f32 %v1421, %v1428
    %v1437 = vadd.f32 %v1435, %v1436
    %v1438 = vtanh.pop %v1437
    %v1439 = vmul.f32 %v1434, %v1438
    %s1440 = scalar_lea.vmem [#allocation3], 56
    %v1441 = vld [vmem:[%s1440] sm:$0xff]
    %v1443 = vcombine.high %v1441, %v1441
    %v1445 = vunpack.c.l.s4 1983009808
    %v1446 = vunpack.c.0.s8 %v1445
    %v1447 = vlaneseq
    %v1448 = vshrl.u32 %v1447, 7
    %v1449 = vsub.s32 %v1446, %v1448
    %v1450 = vrot.slane %v1441, %v1449
    %v1452 = vunpack.c.l.s4 1983009808
    %v1453 = vunpack.c.0.s8 %v1452
    %v1454 = vlaneseq
    %v1455 = vshrl.u32 %v1454, 7
    %v1456 = vsub.s32 %v1453, %v1455
    %v1457 = vrot.slane %v1443, %v1456
    %v1458 = vcombine.high %v1450, %v1450
    %v1459 = vcombine.high %v1457, %v1457
    %1464 = vmatprep.subr.mxu0 %v48
    %1465 = vmatpush1.msra.mxu0 %v47
    %1466 = vmatprep.subr.mxu0 %v52
    %1467 = vmatpush1.msra.mxu0 %v51
    %1468 = vmatprep.subr.mxu0 %v56
    %1469 = vmatpush1.msra.mxu0 %v55
    %1470 = vmatprep.subr.mxu0 %v60
    %1471 = vmatpush1.msra.mxu0 %v59
    %1472 = vmatprep.subr.mxu0 %v64
    %1473 = vmatpush1.msra.mxu0 %v63
    %1474 = vmatprep.subr.mxu0 %v68
    %1475 = vmatpush1.msra.mxu0 %v67
    %1476 = vmatprep.subr.mxu0 %v72
    %1477 = vmatpush1.msra.mxu0 %v71
    %1478 = vmatprep.subr.mxu0 %v76
    %1479 = vmatpush1.msra.mxu0 %v75
    %1480 = vmatprep.subr.mxu0 %v80
    %1481 = vmatpush1.msra.mxu0 %v79
    %1482 = vmatprep.subr.mxu0 %v84
    %1483 = vmatpush1.msra.mxu0 %v83
    %1484 = vmatprep.subr.mxu0 %v88
    %1485 = vmatpush1.msra.mxu0 %v87
    %1486 = vmatprep.subr.mxu0 %v92
    %1487 = vmatpush1.msra.mxu0 %v91
    %1488 = vmatprep.subr.mxu0 %v96
    %1489 = vmatpush1.msra.mxu0 %v95
    %1490 = vmatprep.subr.mxu0 %v100
    %1491 = vmatpush1.msra.mxu0 %v99
    %1492 = vmatprep.subr.mxu0 %v104
    %1493 = vmatpush1.msra.mxu0 %v103
    %1494 = vmatprep.subr.mxu0 %v108
    %1495 = vmatpush1.msra.mxu0 %v107
    %1496 = vmatprep.subr.mxu0 0.0
    %1497 = vmatpush1.msra.mxu0 0.0
    %1498 = vmatprep.subr.mxu0 0.0
    %1499 = vmatpush1.msra.mxu0 0.0
    %1500 = vmatprep.subr.mxu0 0.0
    %1501 = vmatpush1.msra.mxu0 0.0
    %1502 = vmatprep.subr.mxu0 0.0
    %1503 = vmatpush1.msra.mxu0 0.0
    %1504 = vmatprep.subr.mxu0 0.0
    %1505 = vmatpush1.msra.mxu0 0.0
    %1506 = vmatprep.subr.mxu0 0.0
    %1507 = vmatpush1.msra.mxu0 0.0
    %1508 = vmatprep.subr.mxu0 0.0
    %1509 = vmatpush1.msra.mxu0 0.0
    %1510 = vmatprep.subr.mxu0 0.0
    %1511 = vmatpush1.msra.mxu0 0.0
    %1512 = vmatprep.subr.mxu0 0.0
    %1513 = vmatpush1.msra.mxu0 0.0
    %1514 = vmatprep.subr.mxu0 0.0
    %1515 = vmatpush1.msra.mxu0 0.0
    %1516 = vmatprep.subr.mxu0 0.0
    %1517 = vmatpush1.msra.mxu0 0.0
    %1518 = vmatprep.subr.mxu0 0.0
    %1519 = vmatpush1.msra.mxu0 0.0
    %1520 = vmatprep.subr.mxu0 0.0
    %1521 = vmatpush1.msra.mxu0 0.0
    %1522 = vmatprep.subr.mxu0 0.0
    %1523 = vmatpush1.msra.mxu0 0.0
    %1524 = vmatprep.subr.mxu0 0.0
    %1525 = vmatpush1.msra.mxu0 0.0
    %1526 = vmatprep.subr.mxu0 0.0
    %1527 = vmatpush1.msra.mxu0 0.0
    %1528 = vmatprep.mubr.f32.mxu0 0.0
    %1529 = vmatmul.mubr.f32.gmra.mrb[0].mxu0 %v1439
    %v1530 = vpop.f32.mrb[0].mxu0
    %v1531 = vadd.f32 %v1450, %v1530
    %v1532 = vpop.f32.mrb[0].mxu0
    %v1533 = vadd.f32 %v1458, %v1532
    %1534 = vdwg.mxu0
    %1535 = vmatprep.subr.mxu0 %v50
    %1536 = vmatpush1.msra.mxu0 %v49
    %1537 = vmatprep.subr.mxu0 %v54
    %1538 = vmatpush1.msra.mxu0 %v53
    %1539 = vmatprep.subr.mxu0 %v58
    %1540 = vmatpush1.msra.mxu0 %v57
    %1541 = vmatprep.subr.mxu0 %v62
    %1542 = vmatpush1.msra.mxu0 %v61
    %1543 = vmatprep.subr.mxu0 %v66
    %1544 = vmatpush1.msra.mxu0 %v65
    %1545 = vmatprep.subr.mxu0 %v70
    %1546 = vmatpush1.msra.mxu0 %v69
    %1547 = vmatprep.subr.mxu0 %v74
    %1548 = vmatpush1.msra.mxu0 %v73
    %1549 = vmatprep.subr.mxu0 %v78
    %1550 = vmatpush1.msra.mxu0 %v77
    %1551 = vmatprep.subr.mxu0 %v82
    %1552 = vmatpush1.msra.mxu0 %v81
    %1553 = vmatprep.subr.mxu0 %v86
    %1554 = vmatpush1.msra.mxu0 %v85
    %1555 = vmatprep.subr.mxu0 %v90
    %1556 = vmatpush1.msra.mxu0 %v89
    %1557 = vmatprep.subr.mxu0 %v94
    %1558 = vmatpush1.msra.mxu0 %v93
    %1559 = vmatprep.subr.mxu0 %v98
    %1560 = vmatpush1.msra.mxu0 %v97
    %1561 = vmatprep.subr.mxu0 %v102
    %1562 = vmatpush1.msra.mxu0 %v101
    %1563 = vmatprep.subr.mxu0 %v106
    %1564 = vmatpush1.msra.mxu0 %v105
    %1565 = vmatprep.subr.mxu0 %v110
    %1566 = vmatpush1.msra.mxu0 %v109
    %1567 = vmatprep.subr.mxu0 0.0
    %1568 = vmatpush1.msra.mxu0 0.0
    %1569 = vmatprep.subr.mxu0 0.0
    %1570 = vmatpush1.msra.mxu0 0.0
    %1571 = vmatprep.subr.mxu0 0.0
    %1572 = vmatpush1.msra.mxu0 0.0
    %1573 = vmatprep.subr.mxu0 0.0
    %1574 = vmatpush1.msra.mxu0 0.0
    %1575 = vmatprep.subr.mxu0 0.0
    %1576 = vmatpush1.msra.mxu0 0.0
    %1577 = vmatprep.subr.mxu0 0.0
    %1578 = vmatpush1.msra.mxu0 0.0
    %1579 = vmatprep.subr.mxu0 0.0
    %1580 = vmatpush1.msra.mxu0 0.0
    %1581 = vmatprep.subr.mxu0 0.0
    %1582 = vmatpush1.msra.mxu0 0.0
    %1583 = vmatprep.subr.mxu0 0.0
    %1584 = vmatpush1.msra.mxu0 0.0
    %1585 = vmatprep.subr.mxu0 0.0
    %1586 = vmatpush1.msra.mxu0 0.0
    %1587 = vmatprep.subr.mxu0 0.0
    %1588 = vmatpush1.msra.mxu0 0.0
    %1589 = vmatprep.subr.mxu0 0.0
    %1590 = vmatpush1.msra.mxu0 0.0
    %1591 = vmatprep.subr.mxu0 0.0
    %1592 = vmatpush1.msra.mxu0 0.0
    %1593 = vmatprep.subr.mxu0 0.0
    %1594 = vmatpush1.msra.mxu0 0.0
    %1595 = vmatprep.subr.mxu0 0.0
    %1596 = vmatpush1.msra.mxu0 0.0
    %1597 = vmatprep.subr.mxu0 0.0
    %1598 = vmatpush1.msra.mxu0 0.0
    %1599 = vmatprep.mubr.f32.mxu0 0.0
    %1600 = vmatmul.mubr.f32.gmra.mrb[0].mxu0 %v1439
    %v1601 = vpop.f32.mrb[0].mxu0
    %v1602 = vadd.f32 %v1457, %v1601
    %v1603 = vpop.f32.mrb[0].mxu0
    %v1604 = vadd.f32 %v1459, %v1603
    %1605 = vdwg.mxu0
    %v1606 = vxor.u32 %v1531, 2147483648
    %v1607 = vmul.f32 %v1606, 1.442695
    %v1608 = vpow.pop %v1607
    %v1609 = vadd.f32 %v1608, 1.0
    %v1610 = vrcp.pop %v1609
    %v1611 = vmul.f32 1.0, %v1610
    %v1612 = vxor.u32 %v1533, 2147483648
    %v1613 = vmul.f32 %v1612, 1.442695
    %v1614 = vpow.pop %v1613
    %v1615 = vadd.f32 %v1614, 1.0
    %v1616 = vrcp.pop %v1615
    %v1617 = vmul.f32 1.0, %v1616
    %v1618 = vtanh.pop %v1602
    %v1619 = vxor.u32 %v1604, 2147483648
    %v1620 = vmul.f32 %v1619, 1.442695
    %v1621 = vpow.pop %v1620
    %v1622 = vadd.f32 %v1621, 1.0
    %v1623 = vrcp.pop %v1622
    %v1624 = vmul.f32 1.0, %v1623
    %v1625 = vmul.f32 %v1617, %v1437
    %v1626 = vmul.f32 %v1611, %v1618
    %v1627 = vadd.f32 %v1625, %v1626
    %v1628 = vtanh.pop %v1627
    %v1629 = vmul.f32 %v1624, %v1628
    %v1630 = vld [vmem:[%s2] sm:$0x1]
    %v1632 = vlaneseq
    %v1633 = vshrl.u32 %v1632, 7
    %v1634 = vsub.s32 0, %v1633
    %v1635 = vrot.slane %v1630, %v1634
    %v1637 = vmul.f32 %v1629, %v1635
    %vm1638 = vcmask 1041408
    %v1639 = vsel %vm1638, %v1637, 0.0
    %1640 = vadd.xlane.f32.xlu0 %v1639
    %v1641 = vpop.xlane.xlu0 %1640
    %v1642 = vld [vmem:[#allocation2] sm:$0x1]
    %v1644 = vlaneseq
    %v1645 = vshrl.u32 %v1644, 7
    %v1646 = vsub.s32 0, %v1645
    %v1647 = vrot.slane %v1642, %v1646
    %v1649 = vadd.f32 %v1641, %v1647
    %v1650 = vxor.u32 %v1649, 2147483648
    %v1651 = vmul.f32 %v1650, 1.442695
    %v1652 = vpow.pop %v1651
    %v1653 = vadd.f32 %v1652, 1.0
    %v1654 = vrcp.pop %v1653
    %v1655 = vmul.f32 1.0, %v1654
    %vm1656 = vcmask 1024
    %1657 = vst.msk [vmem:[%s4] sm:$0x3] %vm1656, %v1655
    // Predicated region
    $region26: #{tpu_custom_call.1} parent=1 // pred_check
      _
    $region27: #{tpu_custom_call.1} parent=1 // pred_check_branch
      %1659 = sbr.rel (0) target = $region29
    $region28: #{tpu_custom_call.1} parent=1 // pred_region
      _
    $region29: #{tpu_custom_call.1} parent=1 // pred_fallthru
      _
    // Predicated region
    $region30: #{tpu_custom_call.1} parent=1 // pred_check
      _
    $region31: #{tpu_custom_call.1} parent=1 // pred_check_branch
      %1661 = sbr.rel (0) target = $region33
    $region32: #{tpu_custom_call.1} parent=1 // pred_region
      _
    $region33: #{tpu_custom_call.1} parent=1 // pred_fallthru
      _
    %1662 = vsyncpa [#allocation4], 1
    %1663 = vsyncpa [#allocation6], 1

</llo_original>
